<compile_context>
chip_gen: v7x
topology: tpu7x:2x2x1
jax: 0.10.0
libtpu: 0.0.40
codegen_flags: <defaults>
</compile_context>

<pallas_src>
import functools

import jax
import jax.numpy as jnp
from jax.experimental import pallas as pl
from jax.experimental.pallas import tpu as pltpu


# -----------------------------------------------------------------------------
# Plain-JAX helpers mirroring PRIMNET's pyart utilities (standard conventions).
# These are batch-invariant parameter transforms, hoisted out of the kernel.
# -----------------------------------------------------------------------------
def rpy2r(rpy):
    """Roll/pitch/yaw (about x, y, z) -> rotation matrix, R = Rz @ Ry @ Rx."""
    r, p, y = rpy[0], rpy[1], rpy[2]
    cr, sr = jnp.cos(r), jnp.sin(r)
    cp, sp = jnp.cos(p), jnp.sin(p)
    cy, sy = jnp.cos(y), jnp.sin(y)
    return jnp.stack([
        jnp.stack([cy * cp, -sy * cr + cy * sp * sr, sy * sr + cy * sp * cr]),
        jnp.stack([sy * cp, cy * cr + sy * sp * sr, -cy * sr + sy * sp * cr]),
        jnp.stack([-sp, cp * sr, cp * cr]),
    ])


def pr2t(p, R):
    """Position (3,)/(3,1) + rotation (3,3) -> homogeneous transform (4,4)."""
    p = jnp.reshape(p, (3,)).astype(jnp.float32)
    T = jnp.zeros((4, 4), jnp.float32)
    return T.at[:3, :3].set(R.astype(jnp.float32)).at[:3, 3].set(p).at[3, 3].set(1.0)


# -----------------------------------------------------------------------------
# Pallas kernel: per-batch-tile forward-kinematics chain.
# -----------------------------------------------------------------------------
def _fk_chain_kernel(jparams_ref, jq_ref, out_ref, *, joint_types):
    """Chained 4x4 transforms; batch lives on the lane (last) axis.

    jparams_ref : SMEM (J, 24) f32, per-joint batch-invariant scalars
                  [0:16]  T_offset (4x4, row-major)
                  [16:19] unit rotation axis (R joints)
                  [20:23] raw translation axis (P joints)
    jq_ref      : VMEM (J, 4, TB) f32
                  row 0: q, row 1: sin(q*|axis|), row 2: cos(q*|axis|)
    out_ref     : VMEM (J, 16, TB) f32
                  out_ref[j, 4*i + c, b] = cumulative transform after joint j,
                  matrix element (i, c), batch element b.
    """
    tb = out_ref.shape[-1]
    f32 = jnp.float32
    zero = jnp.zeros((tb,), f32)
    one = jnp.ones((tb,), f32)

    # Running cumulative transform: 16 lane-vectors (row-major 4x4), init = I.
    out = [one if r in (0, 5, 10, 15) else zero for r in range(16)]

    for j, jt in enumerate(joint_types):
        # ---- out = out @ T_offset[j]  (batch-invariant scalars from SMEM) ----
        # T joints have T_offset == I, so skip the 64 FMAs.
        if jt != "T":
            toff = [jparams_ref[j, r] for r in range(16)]
            nxt = []
            for i in range(4):
                for c in range(4):
                    acc = out[4 * i] * toff[c]
                    for k in range(1, 4):
                        acc = acc + out[4 * i + k] * toff[4 * k + c]
                    nxt.append(acc)
            out = nxt

        # ---- out = out @ T_joint[j] ------------------------------------------
        if jt == "P":
            # T_joint = [[I, q*axis], [0, 1]]  -> only the translation column changes.
            q = jq_ref[j, 0, :]
            p0 = q * jparams_ref[j, 20]
            p1 = q * jparams_ref[j, 21]
            p2 = q * jparams_ref[j, 22]
            nxt = list(out)
            for i in range(4):
                nxt[4 * i + 3] = (out[4 * i] * p0 + out[4 * i + 1] * p1
                                  + out[4 * i + 2] * p2 + out[4 * i + 3])
            out = nxt
        elif jt == "R":
            # T_joint = [[R, 0], [0, 1]],  R = Rodrigues(unit axis k, theta).
            s = jq_ref[j, 1, :]      # sin(theta)
            cv = jq_ref[j, 2, :]     # cos(theta)
            c1 = 1.0 - cv
            kx = jparams_ref[j, 16]
            ky = jparams_ref[j, 17]
            kz = jparams_ref[j, 18]
            kvec = (kx, ky, kz)
            ksk = ((None, -kz, ky), (kz, None, -kx), (-ky, kx, None))  # skew(k)
            R = [[None] * 3 for _ in range(3)]
            for a in range(3):
                for b in range(3):
                    if a == b:
                        R[a][b] = cv + c1 * (kvec[a] * kvec[a])
                    else:
                        R[a][b] = c1 * (kvec[a] * kvec[b]) + s * ksk[a][b]
            nxt = []
            for i in range(4):
                for c in range(3):
                    nxt.append(out[4 * i] * R[0][c] + out[4 * i + 1] * R[1][c]
                               + out[4 * i + 2] * R[2][c])
                nxt.append(out[4 * i + 3])
            out = nxt
        # F / T joints: T_joint == I, nothing to do.

        # ---- write the cumulative transform for this joint (full-lane stores) --
        for r in range(16):
            out_ref[j, r, :] = out[r]


# -----------------------------------------------------------------------------
# Wrapper: FK_LAYER.forward
# -----------------------------------------------------------------------------
def fk_layer_forward(act_embeds, joint_types, params):
    """Pallas equivalent of FK_LAYER.forward(act_embeds) -> (B, J, 4, 4)."""
    f32 = jnp.float32
    B, E = act_embeds.shape
    J = len(joint_types)

    # -- forward_q + batch-invariant preprocessing in plain JAX (hoisted) -------
    toffs, units, raws, norms, wcols = [], [], [], [], []
    for jt, prm in zip(joint_types, params):
        if jt == "T":
            toffs.append(jnp.eye(4, dtype=f32))
        else:
            toffs.append(pr2t(prm["p_offset"], rpy2r(prm["rpy_offset"])))
        if jt == "R":
            ax = jnp.reshape(prm["axis"], (3,)).astype(f32)
            n = jnp.linalg.norm(ax)
            units.append(ax / jnp.maximum(n, 1e-12))
            norms.append(n)
            raws.append(jnp.zeros((3,), f32))
        elif jt == "P":
            units.append(jnp.zeros((3,), f32))
            norms.append(jnp.zeros((), f32))
            raws.append(jnp.reshape(prm["axis"], (3,)).astype(f32))
        else:  # F / T
            units.append(jnp.zeros((3,), f32))
            norms.append(jnp.zeros((), f32))
            raws.append(jnp.zeros((3,), f32))
        if jt in ("R", "P"):
            wcols.append(jnp.reshape(prm["w_q"], (E,)).astype(f32))
        else:
            wcols.append(jnp.zeros((E,), f32))  # ZeroOutLayer -> q == 0

    jparams = jnp.zeros((J, 24), f32)
    jparams = jparams.at[:, 0:16].set(jnp.stack(toffs).reshape(J, 16))
    jparams = jparams.at[:, 16:19].set(jnp.stack(units))
    jparams = jparams.at[:, 20:23].set(jnp.stack(raws))

    W = jnp.stack(wcols)                            # (J, E)
    q = act_embeds.astype(f32) @ W.T                # (B, J)  == forward_q
    theta = q * jnp.stack(norms)[None, :]           # (B, J)
    jq = jnp.stack(
        [q.T, jnp.sin(theta).T, jnp.cos(theta).T, jnp.zeros((J, B), f32)],
        axis=1)                                     # (J, 4, B), batch on lanes

    # -- Pallas kernel: the per-batch 4x4 chain, batch tiled on the lane axis ----
    tb = B
    for cand in (1024, 512, 256, 128):
        if B % cand == 0:
            tb = cand
            break
    nb = B // tb

    kernel = functools.partial(_fk_chain_kernel, joint_types=tuple(joint_types))
    out_flat = pl.pallas_call(
        kernel,
        grid=(nb,),
        in_specs=[
            pl.BlockSpec(memory_space=pltpu.MemorySpace.SMEM),   # (J, 24) scalars
            pl.BlockSpec((J, 4, tb), lambda b: (0, 0, b)),       # per-joint q/sin/cos
        ],
        out_specs=pl.BlockSpec((J, 16, tb), lambda b: (0, 0, b)),
        out_shape=jax.ShapeDtypeStruct((J, 16, B), f32),
        compiler_params=pltpu.CompilerParams(dimension_semantics=("parallel",)),
    )(jparams, jq)

    outs = jnp.transpose(out_flat, (2, 0, 1)).reshape(B, J, 4, 4)
    return outs.astype(act_embeds.dtype)


# -----------------------------------------------------------------------------
# Pure-JAX reference (for verification only).
# -----------------------------------------------------------------------------
def _rodrigues_batch(axis, q):
    axis = jnp.reshape(axis, (3,)).astype(jnp.float32)
    n = jnp.linalg.norm(axis)
    k = axis / jnp.maximum(n, 1e-12)
    th = q * n
    kx, ky, kz = k[0], k[1], k[2]
    zero = jnp.zeros(())
    K = jnp.stack([jnp.stack([zero, -kz, ky]),
                   jnp.stack([kz, zero, -kx]),
                   jnp.stack([-ky, kx, zero])])
    I = jnp.eye(3, dtype=jnp.float32)
    s = jnp.sin(th)[:, None, None]
    c1 = (1.0 - jnp.cos(th))[:, None, None]
    return I[None] + s * K[None] + c1 * (K @ K)[None]


def fk_reference(act_embeds, joint_types, params):
    B, E = act_embeds.shape
    f32 = jnp.float32
    eye4 = jnp.eye(4, dtype=f32)
    out = jnp.tile(eye4[None], (B, 1, 1))
    outs = []
    for jt, prm in zip(joint_types, params):
        if jt in ("R", "P"):
            q = act_embeds.astype(f32) @ jnp.reshape(prm["w_q"], (E,)).astype(f32)
        else:
            q = jnp.zeros((B,), f32)
        T_off = eye4 if jt == "T" else pr2t(prm["p_offset"], rpy2r(prm["rpy_offset"]))
        if jt in ("F", "T"):
            T_j = jnp.tile(eye4[None], (B, 1, 1))
        elif jt == "P":
            p = q[:, None] * jnp.reshape(prm["axis"], (3,))[None, :].astype(f32)
            T_j = jnp.tile(eye4[None], (B, 1, 1)).at[:, :3, 3].set(p)
        else:  # R
            R = _rodrigues_batch(prm["axis"], q)
            T_j = jnp.tile(eye4[None], (B, 1, 1)).at[:, :3, :3].set(R)
        out = out @ T_off @ T_j
        outs.append(out)
    return jnp.stack(outs, axis=1)


if __name__ == "__main__":
    joint_types = ("F", "R", "P", "T")   # args.joint_seqs
    B, E = 2, 16                         # batch, motor_embed_dim
    p_offset_std, rpy_offset_std = 0.1, 0.1

    keys = iter(jax.random.split(jax.random.PRNGKey(0), 32))
    params = []
    for jt in joint_types:
        prm = {}
        if jt in ("F", "R", "P"):
            prm["p_offset"] = p_offset_std * jax.random.normal(next(keys), (3, 1), jnp.float32)
            prm["rpy_offset"] = rpy_offset_std * jax.random.normal(next(keys), (3,), jnp.float32)
        if jt in ("R", "P"):
            prm["axis"] = p_offset_std * jax.random.normal(next(keys), (3, 1), jnp.float32)
            prm["w_q"] = jax.random.normal(next(keys), (E,), jnp.float32) / jnp.sqrt(E)
        params.append(prm)
    act_embeds = jax.random.normal(next(keys), (B, E), jnp.float32)

    fk = jax.jit(fk_layer_forward, static_argnums=1)
    outs = jax.block_until_ready(fk(act_embeds, joint_types, params))

    ref = fk_reference(act_embeds, joint_types, params)
    assert outs.shape == (B, len(joint_types), 4, 4), outs.shape
    assert jnp.allclose(outs, ref, atol=1e-4, rtol=1e-4), float(jnp.max(jnp.abs(outs - ref)))
    print("KERNEL_OK")
</pallas_src>

<mosaic_0001>
module attributes {stable_mosaic.version = 11 : i64} {
  func.func @_fk_chain_kernel(%arg0: i32, %arg1: memref<4x24xf32, #tpu.memory_space<smem>>, %arg2: memref<4x4x2xf32, #tpu.memory_space<vmem>>, %arg3: memref<4x16x2xf32, #tpu.memory_space<vmem>>) attributes {dimension_semantics = [#tpu.dimension_semantics<parallel>], iteration_bounds = array<i64: 1>, scalar_prefetch = 0 : i64, scratch_operands = 0 : i64, tpu.core_type = #tpu.core_type<tc>, window_params = [{transform_indices = @transform_0, window_bounds = array<i64: 4, 24>}, {transform_indices = @transform_1, window_bounds = array<i64: 4, 4, 2>}, {transform_indices = @transform_2, window_bounds = array<i64: 4, 16, 2>}]} {
    %cst = arith.constant 0.000000e+00 : f32
    %0 = vector.broadcast %cst : f32 to vector<2xf32>
    %cst_0 = arith.constant 1.000000e+00 : f32
    %1 = vector.broadcast %cst_0 : f32 to vector<2xf32>
    %c0 = arith.constant 0 : index
    %c0_1 = arith.constant 0 : index
    %2 = memref.load %arg1[%c0, %c0_1] : memref<4x24xf32, #tpu.memory_space<smem>>
    %c0_2 = arith.constant 0 : index
    %c1 = arith.constant 1 : index
    %3 = memref.load %arg1[%c0_2, %c1] : memref<4x24xf32, #tpu.memory_space<smem>>
    %c0_3 = arith.constant 0 : index
    %c2 = arith.constant 2 : index
    %4 = memref.load %arg1[%c0_3, %c2] : memref<4x24xf32, #tpu.memory_space<smem>>
    %c0_4 = arith.constant 0 : index
    %c3 = arith.constant 3 : index
    %5 = memref.load %arg1[%c0_4, %c3] : memref<4x24xf32, #tpu.memory_space<smem>>
    %c0_5 = arith.constant 0 : index
    %c4 = arith.constant 4 : index
    %6 = memref.load %arg1[%c0_5, %c4] : memref<4x24xf32, #tpu.memory_space<smem>>
    %c0_6 = arith.constant 0 : index
    %c5 = arith.constant 5 : index
    %7 = memref.load %arg1[%c0_6, %c5] : memref<4x24xf32, #tpu.memory_space<smem>>
    %c0_7 = arith.constant 0 : index
    %c6 = arith.constant 6 : index
    %8 = memref.load %arg1[%c0_7, %c6] : memref<4x24xf32, #tpu.memory_space<smem>>
    %c0_8 = arith.constant 0 : index
    %c7 = arith.constant 7 : index
    %9 = memref.load %arg1[%c0_8, %c7] : memref<4x24xf32, #tpu.memory_space<smem>>
    %c0_9 = arith.constant 0 : index
    %c8 = arith.constant 8 : index
    %10 = memref.load %arg1[%c0_9, %c8] : memref<4x24xf32, #tpu.memory_space<smem>>
    %c0_10 = arith.constant 0 : index
    %c9 = arith.constant 9 : index
    %11 = memref.load %arg1[%c0_10, %c9] : memref<4x24xf32, #tpu.memory_space<smem>>
    %c0_11 = arith.constant 0 : index
    %c10 = arith.constant 10 : index
    %12 = memref.load %arg1[%c0_11, %c10] : memref<4x24xf32, #tpu.memory_space<smem>>
    %c0_12 = arith.constant 0 : index
    %c11 = arith.constant 11 : index
    %13 = memref.load %arg1[%c0_12, %c11] : memref<4x24xf32, #tpu.memory_space<smem>>
    %c0_13 = arith.constant 0 : index
    %c12 = arith.constant 12 : index
    %14 = memref.load %arg1[%c0_13, %c12] : memref<4x24xf32, #tpu.memory_space<smem>>
    %c0_14 = arith.constant 0 : index
    %c13 = arith.constant 13 : index
    %15 = memref.load %arg1[%c0_14, %c13] : memref<4x24xf32, #tpu.memory_space<smem>>
    %c0_15 = arith.constant 0 : index
    %c14 = arith.constant 14 : index
    %16 = memref.load %arg1[%c0_15, %c14] : memref<4x24xf32, #tpu.memory_space<smem>>
    %c0_16 = arith.constant 0 : index
    %c15 = arith.constant 15 : index
    %17 = memref.load %arg1[%c0_16, %c15] : memref<4x24xf32, #tpu.memory_space<smem>>
    %18 = vector.broadcast %2 : f32 to vector<2xf32>
    %19 = arith.mulf %1, %18 : vector<2xf32>
    %20 = vector.broadcast %6 : f32 to vector<2xf32>
    %21 = arith.mulf %0, %20 : vector<2xf32>
    %22 = arith.addf %19, %21 : vector<2xf32>
    %23 = vector.broadcast %10 : f32 to vector<2xf32>
    %24 = arith.mulf %0, %23 : vector<2xf32>
    %25 = arith.addf %22, %24 : vector<2xf32>
    %26 = vector.broadcast %14 : f32 to vector<2xf32>
    %27 = arith.mulf %0, %26 : vector<2xf32>
    %28 = arith.addf %25, %27 : vector<2xf32>
    %29 = vector.broadcast %3 : f32 to vector<2xf32>
    %30 = arith.mulf %1, %29 : vector<2xf32>
    %31 = vector.broadcast %7 : f32 to vector<2xf32>
    %32 = arith.mulf %0, %31 : vector<2xf32>
    %33 = arith.addf %30, %32 : vector<2xf32>
    %34 = vector.broadcast %11 : f32 to vector<2xf32>
    %35 = arith.mulf %0, %34 : vector<2xf32>
    %36 = arith.addf %33, %35 : vector<2xf32>
    %37 = vector.broadcast %15 : f32 to vector<2xf32>
    %38 = arith.mulf %0, %37 : vector<2xf32>
    %39 = arith.addf %36, %38 : vector<2xf32>
    %40 = vector.broadcast %4 : f32 to vector<2xf32>
    %41 = arith.mulf %1, %40 : vector<2xf32>
    %42 = vector.broadcast %8 : f32 to vector<2xf32>
    %43 = arith.mulf %0, %42 : vector<2xf32>
    %44 = arith.addf %41, %43 : vector<2xf32>
    %45 = vector.broadcast %12 : f32 to vector<2xf32>
    %46 = arith.mulf %0, %45 : vector<2xf32>
    %47 = arith.addf %44, %46 : vector<2xf32>
    %48 = vector.broadcast %16 : f32 to vector<2xf32>
    %49 = arith.mulf %0, %48 : vector<2xf32>
    %50 = arith.addf %47, %49 : vector<2xf32>
    %51 = vector.broadcast %5 : f32 to vector<2xf32>
    %52 = arith.mulf %1, %51 : vector<2xf32>
    %53 = vector.broadcast %9 : f32 to vector<2xf32>
    %54 = arith.mulf %0, %53 : vector<2xf32>
    %55 = arith.addf %52, %54 : vector<2xf32>
    %56 = vector.broadcast %13 : f32 to vector<2xf32>
    %57 = arith.mulf %0, %56 : vector<2xf32>
    %58 = arith.addf %55, %57 : vector<2xf32>
    %59 = vector.broadcast %17 : f32 to vector<2xf32>
    %60 = arith.mulf %0, %59 : vector<2xf32>
    %61 = arith.addf %58, %60 : vector<2xf32>
    %62 = vector.broadcast %2 : f32 to vector<2xf32>
    %63 = arith.mulf %0, %62 : vector<2xf32>
    %64 = vector.broadcast %6 : f32 to vector<2xf32>
    %65 = arith.mulf %1, %64 : vector<2xf32>
    %66 = arith.addf %63, %65 : vector<2xf32>
    %67 = vector.broadcast %10 : f32 to vector<2xf32>
    %68 = arith.mulf %0, %67 : vector<2xf32>
    %69 = arith.addf %66, %68 : vector<2xf32>
    %70 = vector.broadcast %14 : f32 to vector<2xf32>
    %71 = arith.mulf %0, %70 : vector<2xf32>
    %72 = arith.addf %69, %71 : vector<2xf32>
    %73 = vector.broadcast %3 : f32 to vector<2xf32>
    %74 = arith.mulf %0, %73 : vector<2xf32>
    %75 = vector.broadcast %7 : f32 to vector<2xf32>
    %76 = arith.mulf %1, %75 : vector<2xf32>
    %77 = arith.addf %74, %76 : vector<2xf32>
    %78 = vector.broadcast %11 : f32 to vector<2xf32>
    %79 = arith.mulf %0, %78 : vector<2xf32>
    %80 = arith.addf %77, %79 : vector<2xf32>
    %81 = vector.broadcast %15 : f32 to vector<2xf32>
    %82 = arith.mulf %0, %81 : vector<2xf32>
    %83 = arith.addf %80, %82 : vector<2xf32>
    %84 = vector.broadcast %4 : f32 to vector<2xf32>
    %85 = arith.mulf %0, %84 : vector<2xf32>
    %86 = vector.broadcast %8 : f32 to vector<2xf32>
    %87 = arith.mulf %1, %86 : vector<2xf32>
    %88 = arith.addf %85, %87 : vector<2xf32>
    %89 = vector.broadcast %12 : f32 to vector<2xf32>
    %90 = arith.mulf %0, %89 : vector<2xf32>
    %91 = arith.addf %88, %90 : vector<2xf32>
    %92 = vector.broadcast %16 : f32 to vector<2xf32>
    %93 = arith.mulf %0, %92 : vector<2xf32>
    %94 = arith.addf %91, %93 : vector<2xf32>
    %95 = vector.broadcast %5 : f32 to vector<2xf32>
    %96 = arith.mulf %0, %95 : vector<2xf32>
    %97 = vector.broadcast %9 : f32 to vector<2xf32>
    %98 = arith.mulf %1, %97 : vector<2xf32>
    %99 = arith.addf %96, %98 : vector<2xf32>
    %100 = vector.broadcast %13 : f32 to vector<2xf32>
    %101 = arith.mulf %0, %100 : vector<2xf32>
    %102 = arith.addf %99, %101 : vector<2xf32>
    %103 = vector.broadcast %17 : f32 to vector<2xf32>
    %104 = arith.mulf %0, %103 : vector<2xf32>
    %105 = arith.addf %102, %104 : vector<2xf32>
    %106 = vector.broadcast %2 : f32 to vector<2xf32>
    %107 = arith.mulf %0, %106 : vector<2xf32>
    %108 = vector.broadcast %6 : f32 to vector<2xf32>
    %109 = arith.mulf %0, %108 : vector<2xf32>
    %110 = arith.addf %107, %109 : vector<2xf32>
    %111 = vector.broadcast %10 : f32 to vector<2xf32>
    %112 = arith.mulf %1, %111 : vector<2xf32>
    %113 = arith.addf %110, %112 : vector<2xf32>
    %114 = vector.broadcast %14 : f32 to vector<2xf32>
    %115 = arith.mulf %0, %114 : vector<2xf32>
    %116 = arith.addf %113, %115 : vector<2xf32>
    %117 = vector.broadcast %3 : f32 to vector<2xf32>
    %118 = arith.mulf %0, %117 : vector<2xf32>
    %119 = vector.broadcast %7 : f32 to vector<2xf32>
    %120 = arith.mulf %0, %119 : vector<2xf32>
    %121 = arith.addf %118, %120 : vector<2xf32>
    %122 = vector.broadcast %11 : f32 to vector<2xf32>
    %123 = arith.mulf %1, %122 : vector<2xf32>
    %124 = arith.addf %121, %123 : vector<2xf32>
    %125 = vector.broadcast %15 : f32 to vector<2xf32>
    %126 = arith.mulf %0, %125 : vector<2xf32>
    %127 = arith.addf %124, %126 : vector<2xf32>
    %128 = vector.broadcast %4 : f32 to vector<2xf32>
    %129 = arith.mulf %0, %128 : vector<2xf32>
    %130 = vector.broadcast %8 : f32 to vector<2xf32>
    %131 = arith.mulf %0, %130 : vector<2xf32>
    %132 = arith.addf %129, %131 : vector<2xf32>
    %133 = vector.broadcast %12 : f32 to vector<2xf32>
    %134 = arith.mulf %1, %133 : vector<2xf32>
    %135 = arith.addf %132, %134 : vector<2xf32>
    %136 = vector.broadcast %16 : f32 to vector<2xf32>
    %137 = arith.mulf %0, %136 : vector<2xf32>
    %138 = arith.addf %135, %137 : vector<2xf32>
    %139 = vector.broadcast %5 : f32 to vector<2xf32>
    %140 = arith.mulf %0, %139 : vector<2xf32>
    %141 = vector.broadcast %9 : f32 to vector<2xf32>
    %142 = arith.mulf %0, %141 : vector<2xf32>
    %143 = arith.addf %140, %142 : vector<2xf32>
    %144 = vector.broadcast %13 : f32 to vector<2xf32>
    %145 = arith.mulf %1, %144 : vector<2xf32>
    %146 = arith.addf %143, %145 : vector<2xf32>
    %147 = vector.broadcast %17 : f32 to vector<2xf32>
    %148 = arith.mulf %0, %147 : vector<2xf32>
    %149 = arith.addf %146, %148 : vector<2xf32>
    %150 = vector.broadcast %2 : f32 to vector<2xf32>
    %151 = arith.mulf %0, %150 : vector<2xf32>
    %152 = vector.broadcast %6 : f32 to vector<2xf32>
    %153 = arith.mulf %0, %152 : vector<2xf32>
    %154 = arith.addf %151, %153 : vector<2xf32>
    %155 = vector.broadcast %10 : f32 to vector<2xf32>
    %156 = arith.mulf %0, %155 : vector<2xf32>
    %157 = arith.addf %154, %156 : vector<2xf32>
    %158 = vector.broadcast %14 : f32 to vector<2xf32>
    %159 = arith.mulf %1, %158 : vector<2xf32>
    %160 = arith.addf %157, %159 : vector<2xf32>
    %161 = vector.broadcast %3 : f32 to vector<2xf32>
    %162 = arith.mulf %0, %161 : vector<2xf32>
    %163 = vector.broadcast %7 : f32 to vector<2xf32>
    %164 = arith.mulf %0, %163 : vector<2xf32>
    %165 = arith.addf %162, %164 : vector<2xf32>
    %166 = vector.broadcast %11 : f32 to vector<2xf32>
    %167 = arith.mulf %0, %166 : vector<2xf32>
    %168 = arith.addf %165, %167 : vector<2xf32>
    %169 = vector.broadcast %15 : f32 to vector<2xf32>
    %170 = arith.mulf %1, %169 : vector<2xf32>
    %171 = arith.addf %168, %170 : vector<2xf32>
    %172 = vector.broadcast %4 : f32 to vector<2xf32>
    %173 = arith.mulf %0, %172 : vector<2xf32>
    %174 = vector.broadcast %8 : f32 to vector<2xf32>
    %175 = arith.mulf %0, %174 : vector<2xf32>
    %176 = arith.addf %173, %175 : vector<2xf32>
    %177 = vector.broadcast %12 : f32 to vector<2xf32>
    %178 = arith.mulf %0, %177 : vector<2xf32>
    %179 = arith.addf %176, %178 : vector<2xf32>
    %180 = vector.broadcast %16 : f32 to vector<2xf32>
    %181 = arith.mulf %1, %180 : vector<2xf32>
    %182 = arith.addf %179, %181 : vector<2xf32>
    %183 = vector.broadcast %5 : f32 to vector<2xf32>
    %184 = arith.mulf %0, %183 : vector<2xf32>
    %185 = vector.broadcast %9 : f32 to vector<2xf32>
    %186 = arith.mulf %0, %185 : vector<2xf32>
    %187 = arith.addf %184, %186 : vector<2xf32>
    %188 = vector.broadcast %13 : f32 to vector<2xf32>
    %189 = arith.mulf %0, %188 : vector<2xf32>
    %190 = arith.addf %187, %189 : vector<2xf32>
    %191 = vector.broadcast %17 : f32 to vector<2xf32>
    %192 = arith.mulf %1, %191 : vector<2xf32>
    %193 = arith.addf %190, %192 : vector<2xf32>
    %c0_17 = arith.constant 0 : index
    %c0_18 = arith.constant 0 : index
    %c0_19 = arith.constant 0 : index
    %194 = vector.load %arg3[%c0_17, %c0_18, %c0_19] : memref<4x16x2xf32, #tpu.memory_space<vmem>>, vector<1x1x2xf32>
    %195 = vector.shape_cast %194 : vector<1x1x2xf32> to vector<2xf32>
    %196 = vector.shape_cast %28 : vector<2xf32> to vector<1x1x2xf32>
    tpu.vector_store %arg3[%c0_17, %c0_18, %c0_19], %196 {strides = array<i32>} : memref<4x16x2xf32, #tpu.memory_space<vmem>>, vector<1x1x2xf32>,
    %c0_20 = arith.constant 0 : index
    %c1_21 = arith.constant 1 : index
    %c0_22 = arith.constant 0 : index
    %197 = vector.load %arg3[%c0_20, %c1_21, %c0_22] : memref<4x16x2xf32, #tpu.memory_space<vmem>>, vector<1x1x2xf32>
    %198 = vector.shape_cast %197 : vector<1x1x2xf32> to vector<2xf32>
    %199 = vector.shape_cast %39 : vector<2xf32> to vector<1x1x2xf32>
    tpu.vector_store %arg3[%c0_20, %c1_21, %c0_22], %199 {strides = array<i32>} : memref<4x16x2xf32, #tpu.memory_space<vmem>>, vector<1x1x2xf32>,
    %c0_23 = arith.constant 0 : index
    %c2_24 = arith.constant 2 : index
    %c0_25 = arith.constant 0 : index
    %200 = vector.load %arg3[%c0_23, %c2_24, %c0_25] : memref<4x16x2xf32, #tpu.memory_space<vmem>>, vector<1x1x2xf32>
    %201 = vector.shape_cast %200 : vector<1x1x2xf32> to vector<2xf32>
    %202 = vector.shape_cast %50 : vector<2xf32> to vector<1x1x2xf32>
    tpu.vector_store %arg3[%c0_23, %c2_24, %c0_25], %202 {strides = array<i32>} : memref<4x16x2xf32, #tpu.memory_space<vmem>>, vector<1x1x2xf32>,
    %c0_26 = arith.constant 0 : index
    %c3_27 = arith.constant 3 : index
    %c0_28 = arith.constant 0 : index
    %203 = vector.load %arg3[%c0_26, %c3_27, %c0_28] : memref<4x16x2xf32, #tpu.memory_space<vmem>>, vector<1x1x2xf32>
    %204 = vector.shape_cast %203 : vector<1x1x2xf32> to vector<2xf32>
    %205 = vector.shape_cast %61 : vector<2xf32> to vector<1x1x2xf32>
    tpu.vector_store %arg3[%c0_26, %c3_27, %c0_28], %205 {strides = array<i32>} : memref<4x16x2xf32, #tpu.memory_space<vmem>>, vector<1x1x2xf32>,
    %c0_29 = arith.constant 0 : index
    %c4_30 = arith.constant 4 : index
    %c0_31 = arith.constant 0 : index
    %206 = vector.load %arg3[%c0_29, %c4_30, %c0_31] : memref<4x16x2xf32, #tpu.memory_space<vmem>>, vector<1x1x2xf32>
    %207 = vector.shape_cast %206 : vector<1x1x2xf32> to vector<2xf32>
    %208 = vector.shape_cast %72 : vector<2xf32> to vector<1x1x2xf32>
    tpu.vector_store %arg3[%c0_29, %c4_30, %c0_31], %208 {strides = array<i32>} : memref<4x16x2xf32, #tpu.memory_space<vmem>>, vector<1x1x2xf32>,
    %c0_32 = arith.constant 0 : index
    %c5_33 = arith.constant 5 : index
    %c0_34 = arith.constant 0 : index
    %209 = vector.load %arg3[%c0_32, %c5_33, %c0_34] : memref<4x16x2xf32, #tpu.memory_space<vmem>>, vector<1x1x2xf32>
    %210 = vector.shape_cast %209 : vector<1x1x2xf32> to vector<2xf32>
    %211 = vector.shape_cast %83 : vector<2xf32> to vector<1x1x2xf32>
    tpu.vector_store %arg3[%c0_32, %c5_33, %c0_34], %211 {strides = array<i32>} : memref<4x16x2xf32, #tpu.memory_space<vmem>>, vector<1x1x2xf32>,
    %c0_35 = arith.constant 0 : index
    %c6_36 = arith.constant 6 : index
    %c0_37 = arith.constant 0 : index
    %212 = vector.load %arg3[%c0_35, %c6_36, %c0_37] : memref<4x16x2xf32, #tpu.memory_space<vmem>>, vector<1x1x2xf32>
    %213 = vector.shape_cast %212 : vector<1x1x2xf32> to vector<2xf32>
    %214 = vector.shape_cast %94 : vector<2xf32> to vector<1x1x2xf32>
    tpu.vector_store %arg3[%c0_35, %c6_36, %c0_37], %214 {strides = array<i32>} : memref<4x16x2xf32, #tpu.memory_space<vmem>>, vector<1x1x2xf32>,
    %c0_38 = arith.constant 0 : index
    %c7_39 = arith.constant 7 : index
    %c0_40 = arith.constant 0 : index
    %215 = vector.load %arg3[%c0_38, %c7_39, %c0_40] : memref<4x16x2xf32, #tpu.memory_space<vmem>>, vector<1x1x2xf32>
    %216 = vector.shape_cast %215 : vector<1x1x2xf32> to vector<2xf32>
    %217 = vector.shape_cast %105 : vector<2xf32> to vector<1x1x2xf32>
    tpu.vector_store %arg3[%c0_38, %c7_39, %c0_40], %217 {strides = array<i32>} : memref<4x16x2xf32, #tpu.memory_space<vmem>>, vector<1x1x2xf32>,
    %c0_41 = arith.constant 0 : index
    %c8_42 = arith.constant 8 : index
    %c0_43 = arith.constant 0 : index
    %218 = vector.load %arg3[%c0_41, %c8_42, %c0_43] : memref<4x16x2xf32, #tpu.memory_space<vmem>>, vector<1x1x2xf32>
    %219 = vector.shape_cast %218 : vector<1x1x2xf32> to vector<2xf32>
    %220 = vector.shape_cast %116 : vector<2xf32> to vector<1x1x2xf32>
    tpu.vector_store %arg3[%c0_41, %c8_42, %c0_43], %220 {strides = array<i32>} : memref<4x16x2xf32, #tpu.memory_space<vmem>>, vector<1x1x2xf32>,
    %c0_44 = arith.constant 0 : index
    %c9_45 = arith.constant 9 : index
    %c0_46 = arith.constant 0 : index
    %221 = vector.load %arg3[%c0_44, %c9_45, %c0_46] : memref<4x16x2xf32, #tpu.memory_space<vmem>>, vector<1x1x2xf32>
    %222 = vector.shape_cast %221 : vector<1x1x2xf32> to vector<2xf32>
    %223 = vector.shape_cast %127 : vector<2xf32> to vector<1x1x2xf32>
    tpu.vector_store %arg3[%c0_44, %c9_45, %c0_46], %223 {strides = array<i32>} : memref<4x16x2xf32, #tpu.memory_space<vmem>>, vector<1x1x2xf32>,
    %c0_47 = arith.constant 0 : index
    %c10_48 = arith.constant 10 : index
    %c0_49 = arith.constant 0 : index
    %224 = vector.load %arg3[%c0_47, %c10_48, %c0_49] : memref<4x16x2xf32, #tpu.memory_space<vmem>>, vector<1x1x2xf32>
    %225 = vector.shape_cast %224 : vector<1x1x2xf32> to vector<2xf32>
    %226 = vector.shape_cast %138 : vector<2xf32> to vector<1x1x2xf32>
    tpu.vector_store %arg3[%c0_47, %c10_48, %c0_49], %226 {strides = array<i32>} : memref<4x16x2xf32, #tpu.memory_space<vmem>>, vector<1x1x2xf32>,
    %c0_50 = arith.constant 0 : index
    %c11_51 = arith.constant 11 : index
    %c0_52 = arith.constant 0 : index
    %227 = vector.load %arg3[%c0_50, %c11_51, %c0_52] : memref<4x16x2xf32, #tpu.memory_space<vmem>>, vector<1x1x2xf32>
    %228 = vector.shape_cast %227 : vector<1x1x2xf32> to vector<2xf32>
    %229 = vector.shape_cast %149 : vector<2xf32> to vector<1x1x2xf32>
    tpu.vector_store %arg3[%c0_50, %c11_51, %c0_52], %229 {strides = array<i32>} : memref<4x16x2xf32, #tpu.memory_space<vmem>>, vector<1x1x2xf32>,
    %c0_53 = arith.constant 0 : index
    %c12_54 = arith.constant 12 : index
    %c0_55 = arith.constant 0 : index
    %230 = vector.load %arg3[%c0_53, %c12_54, %c0_55] : memref<4x16x2xf32, #tpu.memory_space<vmem>>, vector<1x1x2xf32>
    %231 = vector.shape_cast %230 : vector<1x1x2xf32> to vector<2xf32>
    %232 = vector.shape_cast %160 : vector<2xf32> to vector<1x1x2xf32>
    tpu.vector_store %arg3[%c0_53, %c12_54, %c0_55], %232 {strides = array<i32>} : memref<4x16x2xf32, #tpu.memory_space<vmem>>, vector<1x1x2xf32>,
    %c0_56 = arith.constant 0 : index
    %c13_57 = arith.constant 13 : index
    %c0_58 = arith.constant 0 : index
    %233 = vector.load %arg3[%c0_56, %c13_57, %c0_58] : memref<4x16x2xf32, #tpu.memory_space<vmem>>, vector<1x1x2xf32>
    %234 = vector.shape_cast %233 : vector<1x1x2xf32> to vector<2xf32>
    %235 = vector.shape_cast %171 : vector<2xf32> to vector<1x1x2xf32>
    tpu.vector_store %arg3[%c0_56, %c13_57, %c0_58], %235 {strides = array<i32>} : memref<4x16x2xf32, #tpu.memory_space<vmem>>, vector<1x1x2xf32>,
    %c0_59 = arith.constant 0 : index
    %c14_60 = arith.constant 14 : index
    %c0_61 = arith.constant 0 : index
    %236 = vector.load %arg3[%c0_59, %c14_60, %c0_61] : memref<4x16x2xf32, #tpu.memory_space<vmem>>, vector<1x1x2xf32>
    %237 = vector.shape_cast %236 : vector<1x1x2xf32> to vector<2xf32>
    %238 = vector.shape_cast %182 : vector<2xf32> to vector<1x1x2xf32>
    tpu.vector_store %arg3[%c0_59, %c14_60, %c0_61], %238 {strides = array<i32>} : memref<4x16x2xf32, #tpu.memory_space<vmem>>, vector<1x1x2xf32>,
    %c0_62 = arith.constant 0 : index
    %c15_63 = arith.constant 15 : index
    %c0_64 = arith.constant 0 : index
    %239 = vector.load %arg3[%c0_62, %c15_63, %c0_64] : memref<4x16x2xf32, #tpu.memory_space<vmem>>, vector<1x1x2xf32>
    %240 = vector.shape_cast %239 : vector<1x1x2xf32> to vector<2xf32>
    %241 = vector.shape_cast %193 : vector<2xf32> to vector<1x1x2xf32>
    tpu.vector_store %arg3[%c0_62, %c15_63, %c0_64], %241 {strides = array<i32>} : memref<4x16x2xf32, #tpu.memory_space<vmem>>, vector<1x1x2xf32>,
    %c1_65 = arith.constant 1 : index
    %c0_66 = arith.constant 0 : index
    %242 = memref.load %arg1[%c1_65, %c0_66] : memref<4x24xf32, #tpu.memory_space<smem>>
    %c1_67 = arith.constant 1 : index
    %c1_68 = arith.constant 1 : index
    %243 = memref.load %arg1[%c1_67, %c1_68] : memref<4x24xf32, #tpu.memory_space<smem>>
    %c1_69 = arith.constant 1 : index
    %c2_70 = arith.constant 2 : index
    %244 = memref.load %arg1[%c1_69, %c2_70] : memref<4x24xf32, #tpu.memory_space<smem>>
    %c1_71 = arith.constant 1 : index
    %c3_72 = arith.constant 3 : index
    %245 = memref.load %arg1[%c1_71, %c3_72] : memref<4x24xf32, #tpu.memory_space<smem>>
    %c1_73 = arith.constant 1 : index
    %c4_74 = arith.constant 4 : index
    %246 = memref.load %arg1[%c1_73, %c4_74] : memref<4x24xf32, #tpu.memory_space<smem>>
    %c1_75 = arith.constant 1 : index
    %c5_76 = arith.constant 5 : index
    %247 = memref.load %arg1[%c1_75, %c5_76] : memref<4x24xf32, #tpu.memory_space<smem>>
    %c1_77 = arith.constant 1 : index
    %c6_78 = arith.constant 6 : index
    %248 = memref.load %arg1[%c1_77, %c6_78] : memref<4x24xf32, #tpu.memory_space<smem>>
    %c1_79 = arith.constant 1 : index
    %c7_80 = arith.constant 7 : index
    %249 = memref.load %arg1[%c1_79, %c7_80] : memref<4x24xf32, #tpu.memory_space<smem>>
    %c1_81 = arith.constant 1 : index
    %c8_82 = arith.constant 8 : index
    %250 = memref.load %arg1[%c1_81, %c8_82] : memref<4x24xf32, #tpu.memory_space<smem>>
    %c1_83 = arith.constant 1 : index
    %c9_84 = arith.constant 9 : index
    %251 = memref.load %arg1[%c1_83, %c9_84] : memref<4x24xf32, #tpu.memory_space<smem>>
    %c1_85 = arith.constant 1 : index
    %c10_86 = arith.constant 10 : index
    %252 = memref.load %arg1[%c1_85, %c10_86] : memref<4x24xf32, #tpu.memory_space<smem>>
    %c1_87 = arith.constant 1 : index
    %c11_88 = arith.constant 11 : index
    %253 = memref.load %arg1[%c1_87, %c11_88] : memref<4x24xf32, #tpu.memory_space<smem>>
    %c1_89 = arith.constant 1 : index
    %c12_90 = arith.constant 12 : index
    %254 = memref.load %arg1[%c1_89, %c12_90] : memref<4x24xf32, #tpu.memory_space<smem>>
    %c1_91 = arith.constant 1 : index
    %c13_92 = arith.constant 13 : index
    %255 = memref.load %arg1[%c1_91, %c13_92] : memref<4x24xf32, #tpu.memory_space<smem>>
    %c1_93 = arith.constant 1 : index
    %c14_94 = arith.constant 14 : index
    %256 = memref.load %arg1[%c1_93, %c14_94] : memref<4x24xf32, #tpu.memory_space<smem>>
    %c1_95 = arith.constant 1 : index
    %c15_96 = arith.constant 15 : index
    %257 = memref.load %arg1[%c1_95, %c15_96] : memref<4x24xf32, #tpu.memory_space<smem>>
    %258 = vector.broadcast %242 : f32 to vector<2xf32>
    %259 = arith.mulf %28, %258 : vector<2xf32>
    %260 = vector.broadcast %246 : f32 to vector<2xf32>
    %261 = arith.mulf %39, %260 : vector<2xf32>
    %262 = arith.addf %259, %261 : vector<2xf32>
    %263 = vector.broadcast %250 : f32 to vector<2xf32>
    %264 = arith.mulf %50, %263 : vector<2xf32>
    %265 = arith.addf %262, %264 : vector<2xf32>
    %266 = vector.broadcast %254 : f32 to vector<2xf32>
    %267 = arith.mulf %61, %266 : vector<2xf32>
    %268 = arith.addf %265, %267 : vector<2xf32>
    %269 = vector.broadcast %243 : f32 to vector<2xf32>
    %270 = arith.mulf %28, %269 : vector<2xf32>
    %271 = vector.broadcast %247 : f32 to vector<2xf32>
    %272 = arith.mulf %39, %271 : vector<2xf32>
    %273 = arith.addf %270, %272 : vector<2xf32>
    %274 = vector.broadcast %251 : f32 to vector<2xf32>
    %275 = arith.mulf %50, %274 : vector<2xf32>
    %276 = arith.addf %273, %275 : vector<2xf32>
    %277 = vector.broadcast %255 : f32 to vector<2xf32>
    %278 = arith.mulf %61, %277 : vector<2xf32>
    %279 = arith.addf %276, %278 : vector<2xf32>
    %280 = vector.broadcast %244 : f32 to vector<2xf32>
    %281 = arith.mulf %28, %280 : vector<2xf32>
    %282 = vector.broadcast %248 : f32 to vector<2xf32>
    %283 = arith.mulf %39, %282 : vector<2xf32>
    %284 = arith.addf %281, %283 : vector<2xf32>
    %285 = vector.broadcast %252 : f32 to vector<2xf32>
    %286 = arith.mulf %50, %285 : vector<2xf32>
    %287 = arith.addf %284, %286 : vector<2xf32>
    %288 = vector.broadcast %256 : f32 to vector<2xf32>
    %289 = arith.mulf %61, %288 : vector<2xf32>
    %290 = arith.addf %287, %289 : vector<2xf32>
    %291 = vector.broadcast %245 : f32 to vector<2xf32>
    %292 = arith.mulf %28, %291 : vector<2xf32>
    %293 = vector.broadcast %249 : f32 to vector<2xf32>
    %294 = arith.mulf %39, %293 : vector<2xf32>
    %295 = arith.addf %292, %294 : vector<2xf32>
    %296 = vector.broadcast %253 : f32 to vector<2xf32>
    %297 = arith.mulf %50, %296 : vector<2xf32>
    %298 = arith.addf %295, %297 : vector<2xf32>
    %299 = vector.broadcast %257 : f32 to vector<2xf32>
    %300 = arith.mulf %61, %299 : vector<2xf32>
    %301 = arith.addf %298, %300 : vector<2xf32>
    %302 = vector.broadcast %242 : f32 to vector<2xf32>
    %303 = arith.mulf %72, %302 : vector<2xf32>
    %304 = vector.broadcast %246 : f32 to vector<2xf32>
    %305 = arith.mulf %83, %304 : vector<2xf32>
    %306 = arith.addf %303, %305 : vector<2xf32>
    %307 = vector.broadcast %250 : f32 to vector<2xf32>
    %308 = arith.mulf %94, %307 : vector<2xf32>
    %309 = arith.addf %306, %308 : vector<2xf32>
    %310 = vector.broadcast %254 : f32 to vector<2xf32>
    %311 = arith.mulf %105, %310 : vector<2xf32>
    %312 = arith.addf %309, %311 : vector<2xf32>
    %313 = vector.broadcast %243 : f32 to vector<2xf32>
    %314 = arith.mulf %72, %313 : vector<2xf32>
    %315 = vector.broadcast %247 : f32 to vector<2xf32>
    %316 = arith.mulf %83, %315 : vector<2xf32>
    %317 = arith.addf %314, %316 : vector<2xf32>
    %318 = vector.broadcast %251 : f32 to vector<2xf32>
    %319 = arith.mulf %94, %318 : vector<2xf32>
    %320 = arith.addf %317, %319 : vector<2xf32>
    %321 = vector.broadcast %255 : f32 to vector<2xf32>
    %322 = arith.mulf %105, %321 : vector<2xf32>
    %323 = arith.addf %320, %322 : vector<2xf32>
    %324 = vector.broadcast %244 : f32 to vector<2xf32>
    %325 = arith.mulf %72, %324 : vector<2xf32>
    %326 = vector.broadcast %248 : f32 to vector<2xf32>
    %327 = arith.mulf %83, %326 : vector<2xf32>
    %328 = arith.addf %325, %327 : vector<2xf32>
    %329 = vector.broadcast %252 : f32 to vector<2xf32>
    %330 = arith.mulf %94, %329 : vector<2xf32>
    %331 = arith.addf %328, %330 : vector<2xf32>
    %332 = vector.broadcast %256 : f32 to vector<2xf32>
    %333 = arith.mulf %105, %332 : vector<2xf32>
    %334 = arith.addf %331, %333 : vector<2xf32>
    %335 = vector.broadcast %245 : f32 to vector<2xf32>
    %336 = arith.mulf %72, %335 : vector<2xf32>
    %337 = vector.broadcast %249 : f32 to vector<2xf32>
    %338 = arith.mulf %83, %337 : vector<2xf32>
    %339 = arith.addf %336, %338 : vector<2xf32>
    %340 = vector.broadcast %253 : f32 to vector<2xf32>
    %341 = arith.mulf %94, %340 : vector<2xf32>
    %342 = arith.addf %339, %341 : vector<2xf32>
    %343 = vector.broadcast %257 : f32 to vector<2xf32>
    %344 = arith.mulf %105, %343 : vector<2xf32>
    %345 = arith.addf %342, %344 : vector<2xf32>
    %346 = vector.broadcast %242 : f32 to vector<2xf32>
    %347 = arith.mulf %116, %346 : vector<2xf32>
    %348 = vector.broadcast %246 : f32 to vector<2xf32>
    %349 = arith.mulf %127, %348 : vector<2xf32>
    %350 = arith.addf %347, %349 : vector<2xf32>
    %351 = vector.broadcast %250 : f32 to vector<2xf32>
    %352 = arith.mulf %138, %351 : vector<2xf32>
    %353 = arith.addf %350, %352 : vector<2xf32>
    %354 = vector.broadcast %254 : f32 to vector<2xf32>
    %355 = arith.mulf %149, %354 : vector<2xf32>
    %356 = arith.addf %353, %355 : vector<2xf32>
    %357 = vector.broadcast %243 : f32 to vector<2xf32>
    %358 = arith.mulf %116, %357 : vector<2xf32>
    %359 = vector.broadcast %247 : f32 to vector<2xf32>
    %360 = arith.mulf %127, %359 : vector<2xf32>
    %361 = arith.addf %358, %360 : vector<2xf32>
    %362 = vector.broadcast %251 : f32 to vector<2xf32>
    %363 = arith.mulf %138, %362 : vector<2xf32>
    %364 = arith.addf %361, %363 : vector<2xf32>
    %365 = vector.broadcast %255 : f32 to vector<2xf32>
    %366 = arith.mulf %149, %365 : vector<2xf32>
    %367 = arith.addf %364, %366 : vector<2xf32>
    %368 = vector.broadcast %244 : f32 to vector<2xf32>
    %369 = arith.mulf %116, %368 : vector<2xf32>
    %370 = vector.broadcast %248 : f32 to vector<2xf32>
    %371 = arith.mulf %127, %370 : vector<2xf32>
    %372 = arith.addf %369, %371 : vector<2xf32>
    %373 = vector.broadcast %252 : f32 to vector<2xf32>
    %374 = arith.mulf %138, %373 : vector<2xf32>
    %375 = arith.addf %372, %374 : vector<2xf32>
    %376 = vector.broadcast %256 : f32 to vector<2xf32>
    %377 = arith.mulf %149, %376 : vector<2xf32>
    %378 = arith.addf %375, %377 : vector<2xf32>
    %379 = vector.broadcast %245 : f32 to vector<2xf32>
    %380 = arith.mulf %116, %379 : vector<2xf32>
    %381 = vector.broadcast %249 : f32 to vector<2xf32>
    %382 = arith.mulf %127, %381 : vector<2xf32>
    %383 = arith.addf %380, %382 : vector<2xf32>
    %384 = vector.broadcast %253 : f32 to vector<2xf32>
    %385 = arith.mulf %138, %384 : vector<2xf32>
    %386 = arith.addf %383, %385 : vector<2xf32>
    %387 = vector.broadcast %257 : f32 to vector<2xf32>
    %388 = arith.mulf %149, %387 : vector<2xf32>
    %389 = arith.addf %386, %388 : vector<2xf32>
    %390 = vector.broadcast %242 : f32 to vector<2xf32>
    %391 = arith.mulf %160, %390 : vector<2xf32>
    %392 = vector.broadcast %246 : f32 to vector<2xf32>
    %393 = arith.mulf %171, %392 : vector<2xf32>
    %394 = arith.addf %391, %393 : vector<2xf32>
    %395 = vector.broadcast %250 : f32 to vector<2xf32>
    %396 = arith.mulf %182, %395 : vector<2xf32>
    %397 = arith.addf %394, %396 : vector<2xf32>
    %398 = vector.broadcast %254 : f32 to vector<2xf32>
    %399 = arith.mulf %193, %398 : vector<2xf32>
    %400 = arith.addf %397, %399 : vector<2xf32>
    %401 = vector.broadcast %243 : f32 to vector<2xf32>
    %402 = arith.mulf %160, %401 : vector<2xf32>
    %403 = vector.broadcast %247 : f32 to vector<2xf32>
    %404 = arith.mulf %171, %403 : vector<2xf32>
    %405 = arith.addf %402, %404 : vector<2xf32>
    %406 = vector.broadcast %251 : f32 to vector<2xf32>
    %407 = arith.mulf %182, %406 : vector<2xf32>
    %408 = arith.addf %405, %407 : vector<2xf32>
    %409 = vector.broadcast %255 : f32 to vector<2xf32>
    %410 = arith.mulf %193, %409 : vector<2xf32>
    %411 = arith.addf %408, %410 : vector<2xf32>
    %412 = vector.broadcast %244 : f32 to vector<2xf32>
    %413 = arith.mulf %160, %412 : vector<2xf32>
    %414 = vector.broadcast %248 : f32 to vector<2xf32>
    %415 = arith.mulf %171, %414 : vector<2xf32>
    %416 = arith.addf %413, %415 : vector<2xf32>
    %417 = vector.broadcast %252 : f32 to vector<2xf32>
    %418 = arith.mulf %182, %417 : vector<2xf32>
    %419 = arith.addf %416, %418 : vector<2xf32>
    %420 = vector.broadcast %256 : f32 to vector<2xf32>
    %421 = arith.mulf %193, %420 : vector<2xf32>
    %422 = arith.addf %419, %421 : vector<2xf32>
    %423 = vector.broadcast %245 : f32 to vector<2xf32>
    %424 = arith.mulf %160, %423 : vector<2xf32>
    %425 = vector.broadcast %249 : f32 to vector<2xf32>
    %426 = arith.mulf %171, %425 : vector<2xf32>
    %427 = arith.addf %424, %426 : vector<2xf32>
    %428 = vector.broadcast %253 : f32 to vector<2xf32>
    %429 = arith.mulf %182, %428 : vector<2xf32>
    %430 = arith.addf %427, %429 : vector<2xf32>
    %431 = vector.broadcast %257 : f32 to vector<2xf32>
    %432 = arith.mulf %193, %431 : vector<2xf32>
    %433 = arith.addf %430, %432 : vector<2xf32>
    %c1_97 = arith.constant 1 : index
    %c1_98 = arith.constant 1 : index
    %c0_99 = arith.constant 0 : index
    %434 = vector.load %arg2[%c1_97, %c1_98, %c0_99] : memref<4x4x2xf32, #tpu.memory_space<vmem>>, vector<1x1x2xf32>
    %435 = vector.shape_cast %434 : vector<1x1x2xf32> to vector<2xf32>
    %c1_100 = arith.constant 1 : index
    %c2_101 = arith.constant 2 : index
    %c0_102 = arith.constant 0 : index
    %436 = vector.load %arg2[%c1_100, %c2_101, %c0_102] : memref<4x4x2xf32, #tpu.memory_space<vmem>>, vector<1x1x2xf32>
    %437 = vector.shape_cast %436 : vector<1x1x2xf32> to vector<2xf32>
    %cst_103 = arith.constant 1.000000e+00 : f32
    %438 = vector.broadcast %cst_103 : f32 to vector<2xf32>
    %439 = arith.subf %438, %437 : vector<2xf32>
    %c1_104 = arith.constant 1 : index
    %c16 = arith.constant 16 : index
    %440 = memref.load %arg1[%c1_104, %c16] : memref<4x24xf32, #tpu.memory_space<smem>>
    %c1_105 = arith.constant 1 : index
    %c17 = arith.constant 17 : index
    %441 = memref.load %arg1[%c1_105, %c17] : memref<4x24xf32, #tpu.memory_space<smem>>
    %c1_106 = arith.constant 1 : index
    %c18 = arith.constant 18 : index
    %442 = memref.load %arg1[%c1_106, %c18] : memref<4x24xf32, #tpu.memory_space<smem>>
    %cst_107 = arith.constant 0.000000e+00 : f32
    %443 = arith.subf %cst_107, %442 : f32
    %cst_108 = arith.constant 0.000000e+00 : f32
    %444 = arith.subf %cst_108, %440 : f32
    %cst_109 = arith.constant 0.000000e+00 : f32
    %445 = arith.subf %cst_109, %441 : f32
    %446 = arith.mulf %440, %440 : f32
    %447 = vector.broadcast %446 : f32 to vector<2xf32>
    %448 = arith.mulf %439, %447 : vector<2xf32>
    %449 = arith.addf %437, %448 : vector<2xf32>
    %450 = arith.mulf %440, %441 : f32
    %451 = vector.broadcast %450 : f32 to vector<2xf32>
    %452 = arith.mulf %439, %451 : vector<2xf32>
    %453 = vector.broadcast %443 : f32 to vector<2xf32>
    %454 = arith.mulf %435, %453 : vector<2xf32>
    %455 = arith.addf %452, %454 : vector<2xf32>
    %456 = arith.mulf %440, %442 : f32
    %457 = vector.broadcast %456 : f32 to vector<2xf32>
    %458 = arith.mulf %439, %457 : vector<2xf32>
    %459 = vector.broadcast %441 : f32 to vector<2xf32>
    %460 = arith.mulf %435, %459 : vector<2xf32>
    %461 = arith.addf %458, %460 : vector<2xf32>
    %462 = arith.mulf %441, %440 : f32
    %463 = vector.broadcast %462 : f32 to vector<2xf32>
    %464 = arith.mulf %439, %463 : vector<2xf32>
    %465 = vector.broadcast %442 : f32 to vector<2xf32>
    %466 = arith.mulf %435, %465 : vector<2xf32>
    %467 = arith.addf %464, %466 : vector<2xf32>
    %468 = arith.mulf %441, %441 : f32
    %469 = vector.broadcast %468 : f32 to vector<2xf32>
    %470 = arith.mulf %439, %469 : vector<2xf32>
    %471 = arith.addf %437, %470 : vector<2xf32>
    %472 = arith.mulf %441, %442 : f32
    %473 = vector.broadcast %472 : f32 to vector<2xf32>
    %474 = arith.mulf %439, %473 : vector<2xf32>
    %475 = vector.broadcast %444 : f32 to vector<2xf32>
    %476 = arith.mulf %435, %475 : vector<2xf32>
    %477 = arith.addf %474, %476 : vector<2xf32>
    %478 = arith.mulf %442, %440 : f32
    %479 = vector.broadcast %478 : f32 to vector<2xf32>
    %480 = arith.mulf %439, %479 : vector<2xf32>
    %481 = vector.broadcast %445 : f32 to vector<2xf32>
    %482 = arith.mulf %435, %481 : vector<2xf32>
    %483 = arith.addf %480, %482 : vector<2xf32>
    %484 = arith.mulf %442, %441 : f32
    %485 = vector.broadcast %484 : f32 to vector<2xf32>
    %486 = arith.mulf %439, %485 : vector<2xf32>
    %487 = vector.broadcast %440 : f32 to vector<2xf32>
    %488 = arith.mulf %435, %487 : vector<2xf32>
    %489 = arith.addf %486, %488 : vector<2xf32>
    %490 = arith.mulf %442, %442 : f32
    %491 = vector.broadcast %490 : f32 to vector<2xf32>
    %492 = arith.mulf %439, %491 : vector<2xf32>
    %493 = arith.addf %437, %492 : vector<2xf32>
    %494 = arith.mulf %268, %449 : vector<2xf32>
    %495 = arith.mulf %279, %467 : vector<2xf32>
    %496 = arith.addf %494, %495 : vector<2xf32>
    %497 = arith.mulf %290, %483 : vector<2xf32>
    %498 = arith.addf %496, %497 : vector<2xf32>
    %499 = arith.mulf %268, %455 : vector<2xf32>
    %500 = arith.mulf %279, %471 : vector<2xf32>
    %501 = arith.addf %499, %500 : vector<2xf32>
    %502 = arith.mulf %290, %489 : vector<2xf32>
    %503 = arith.addf %501, %502 : vector<2xf32>
    %504 = arith.mulf %268, %461 : vector<2xf32>
    %505 = arith.mulf %279, %477 : vector<2xf32>
    %506 = arith.addf %504, %505 : vector<2xf32>
    %507 = arith.mulf %290, %493 : vector<2xf32>
    %508 = arith.addf %506, %507 : vector<2xf32>
    %509 = arith.mulf %312, %449 : vector<2xf32>
    %510 = arith.mulf %323, %467 : vector<2xf32>
    %511 = arith.addf %509, %510 : vector<2xf32>
    %512 = arith.mulf %334, %483 : vector<2xf32>
    %513 = arith.addf %511, %512 : vector<2xf32>
    %514 = arith.mulf %312, %455 : vector<2xf32>
    %515 = arith.mulf %323, %471 : vector<2xf32>
    %516 = arith.addf %514, %515 : vector<2xf32>
    %517 = arith.mulf %334, %489 : vector<2xf32>
    %518 = arith.addf %516, %517 : vector<2xf32>
    %519 = arith.mulf %312, %461 : vector<2xf32>
    %520 = arith.mulf %323, %477 : vector<2xf32>
    %521 = arith.addf %519, %520 : vector<2xf32>
    %522 = arith.mulf %334, %493 : vector<2xf32>
    %523 = arith.addf %521, %522 : vector<2xf32>
    %524 = arith.mulf %356, %449 : vector<2xf32>
    %525 = arith.mulf %367, %467 : vector<2xf32>
    %526 = arith.addf %524, %525 : vector<2xf32>
    %527 = arith.mulf %378, %483 : vector<2xf32>
    %528 = arith.addf %526, %527 : vector<2xf32>
    %529 = arith.mulf %356, %455 : vector<2xf32>
    %530 = arith.mulf %367, %471 : vector<2xf32>
    %531 = arith.addf %529, %530 : vector<2xf32>
    %532 = arith.mulf %378, %489 : vector<2xf32>
    %533 = arith.addf %531, %532 : vector<2xf32>
    %534 = arith.mulf %356, %461 : vector<2xf32>
    %535 = arith.mulf %367, %477 : vector<2xf32>
    %536 = arith.addf %534, %535 : vector<2xf32>
    %537 = arith.mulf %378, %493 : vector<2xf32>
    %538 = arith.addf %536, %537 : vector<2xf32>
    %539 = arith.mulf %400, %449 : vector<2xf32>
    %540 = arith.mulf %411, %467 : vector<2xf32>
    %541 = arith.addf %539, %540 : vector<2xf32>
    %542 = arith.mulf %422, %483 : vector<2xf32>
    %543 = arith.addf %541, %542 : vector<2xf32>
    %544 = arith.mulf %400, %455 : vector<2xf32>
    %545 = arith.mulf %411, %471 : vector<2xf32>
    %546 = arith.addf %544, %545 : vector<2xf32>
    %547 = arith.mulf %422, %489 : vector<2xf32>
    %548 = arith.addf %546, %547 : vector<2xf32>
    %549 = arith.mulf %400, %461 : vector<2xf32>
    %550 = arith.mulf %411, %477 : vector<2xf32>
    %551 = arith.addf %549, %550 : vector<2xf32>
    %552 = arith.mulf %422, %493 : vector<2xf32>
    %553 = arith.addf %551, %552 : vector<2xf32>
    %c1_110 = arith.constant 1 : index
    %c0_111 = arith.constant 0 : index
    %c0_112 = arith.constant 0 : index
    %554 = vector.load %arg3[%c1_110, %c0_111, %c0_112] : memref<4x16x2xf32, #tpu.memory_space<vmem>>, vector<1x1x2xf32>
    %555 = vector.shape_cast %554 : vector<1x1x2xf32> to vector<2xf32>
    %556 = vector.shape_cast %498 : vector<2xf32> to vector<1x1x2xf32>
    tpu.vector_store %arg3[%c1_110, %c0_111, %c0_112], %556 {strides = array<i32>} : memref<4x16x2xf32, #tpu.memory_space<vmem>>, vector<1x1x2xf32>,
    %c1_113 = arith.constant 1 : index
    %c1_114 = arith.constant 1 : index
    %c0_115 = arith.constant 0 : index
    %557 = vector.load %arg3[%c1_113, %c1_114, %c0_115] : memref<4x16x2xf32, #tpu.memory_space<vmem>>, vector<1x1x2xf32>
    %558 = vector.shape_cast %557 : vector<1x1x2xf32> to vector<2xf32>
    %559 = vector.shape_cast %503 : vector<2xf32> to vector<1x1x2xf32>
    tpu.vector_store %arg3[%c1_113, %c1_114, %c0_115], %559 {strides = array<i32>} : memref<4x16x2xf32, #tpu.memory_space<vmem>>, vector<1x1x2xf32>,
    %c1_116 = arith.constant 1 : index
    %c2_117 = arith.constant 2 : index
    %c0_118 = arith.constant 0 : index
    %560 = vector.load %arg3[%c1_116, %c2_117, %c0_118] : memref<4x16x2xf32, #tpu.memory_space<vmem>>, vector<1x1x2xf32>
    %561 = vector.shape_cast %560 : vector<1x1x2xf32> to vector<2xf32>
    %562 = vector.shape_cast %508 : vector<2xf32> to vector<1x1x2xf32>
    tpu.vector_store %arg3[%c1_116, %c2_117, %c0_118], %562 {strides = array<i32>} : memref<4x16x2xf32, #tpu.memory_space<vmem>>, vector<1x1x2xf32>,
    %c1_119 = arith.constant 1 : index
    %c3_120 = arith.constant 3 : index
    %c0_121 = arith.constant 0 : index
    %563 = vector.load %arg3[%c1_119, %c3_120, %c0_121] : memref<4x16x2xf32, #tpu.memory_space<vmem>>, vector<1x1x2xf32>
    %564 = vector.shape_cast %563 : vector<1x1x2xf32> to vector<2xf32>
    %565 = vector.shape_cast %301 : vector<2xf32> to vector<1x1x2xf32>
    tpu.vector_store %arg3[%c1_119, %c3_120, %c0_121], %565 {strides = array<i32>} : memref<4x16x2xf32, #tpu.memory_space<vmem>>, vector<1x1x2xf32>,
    %c1_122 = arith.constant 1 : index
    %c4_123 = arith.constant 4 : index
    %c0_124 = arith.constant 0 : index
    %566 = vector.load %arg3[%c1_122, %c4_123, %c0_124] : memref<4x16x2xf32, #tpu.memory_space<vmem>>, vector<1x1x2xf32>
    %567 = vector.shape_cast %566 : vector<1x1x2xf32> to vector<2xf32>
    %568 = vector.shape_cast %513 : vector<2xf32> to vector<1x1x2xf32>
    tpu.vector_store %arg3[%c1_122, %c4_123, %c0_124], %568 {strides = array<i32>} : memref<4x16x2xf32, #tpu.memory_space<vmem>>, vector<1x1x2xf32>,
    %c1_125 = arith.constant 1 : index
    %c5_126 = arith.constant 5 : index
    %c0_127 = arith.constant 0 : index
    %569 = vector.load %arg3[%c1_125, %c5_126, %c0_127] : memref<4x16x2xf32, #tpu.memory_space<vmem>>, vector<1x1x2xf32>
    %570 = vector.shape_cast %569 : vector<1x1x2xf32> to vector<2xf32>
    %571 = vector.shape_cast %518 : vector<2xf32> to vector<1x1x2xf32>
    tpu.vector_store %arg3[%c1_125, %c5_126, %c0_127], %571 {strides = array<i32>} : memref<4x16x2xf32, #tpu.memory_space<vmem>>, vector<1x1x2xf32>,
    %c1_128 = arith.constant 1 : index
    %c6_129 = arith.constant 6 : index
    %c0_130 = arith.constant 0 : index
    %572 = vector.load %arg3[%c1_128, %c6_129, %c0_130] : memref<4x16x2xf32, #tpu.memory_space<vmem>>, vector<1x1x2xf32>
    %573 = vector.shape_cast %572 : vector<1x1x2xf32> to vector<2xf32>
    %574 = vector.shape_cast %523 : vector<2xf32> to vector<1x1x2xf32>
    tpu.vector_store %arg3[%c1_128, %c6_129, %c0_130], %574 {strides = array<i32>} : memref<4x16x2xf32, #tpu.memory_space<vmem>>, vector<1x1x2xf32>,
    %c1_131 = arith.constant 1 : index
    %c7_132 = arith.constant 7 : index
    %c0_133 = arith.constant 0 : index
    %575 = vector.load %arg3[%c1_131, %c7_132, %c0_133] : memref<4x16x2xf32, #tpu.memory_space<vmem>>, vector<1x1x2xf32>
    %576 = vector.shape_cast %575 : vector<1x1x2xf32> to vector<2xf32>
    %577 = vector.shape_cast %345 : vector<2xf32> to vector<1x1x2xf32>
    tpu.vector_store %arg3[%c1_131, %c7_132, %c0_133], %577 {strides = array<i32>} : memref<4x16x2xf32, #tpu.memory_space<vmem>>, vector<1x1x2xf32>,
    %c1_134 = arith.constant 1 : index
    %c8_135 = arith.constant 8 : index
    %c0_136 = arith.constant 0 : index
    %578 = vector.load %arg3[%c1_134, %c8_135, %c0_136] : memref<4x16x2xf32, #tpu.memory_space<vmem>>, vector<1x1x2xf32>
    %579 = vector.shape_cast %578 : vector<1x1x2xf32> to vector<2xf32>
    %580 = vector.shape_cast %528 : vector<2xf32> to vector<1x1x2xf32>
    tpu.vector_store %arg3[%c1_134, %c8_135, %c0_136], %580 {strides = array<i32>} : memref<4x16x2xf32, #tpu.memory_space<vmem>>, vector<1x1x2xf32>,
    %c1_137 = arith.constant 1 : index
    %c9_138 = arith.constant 9 : index
    %c0_139 = arith.constant 0 : index
    %581 = vector.load %arg3[%c1_137, %c9_138, %c0_139] : memref<4x16x2xf32, #tpu.memory_space<vmem>>, vector<1x1x2xf32>
    %582 = vector.shape_cast %581 : vector<1x1x2xf32> to vector<2xf32>
    %583 = vector.shape_cast %533 : vector<2xf32> to vector<1x1x2xf32>
    tpu.vector_store %arg3[%c1_137, %c9_138, %c0_139], %583 {strides = array<i32>} : memref<4x16x2xf32, #tpu.memory_space<vmem>>, vector<1x1x2xf32>,
    %c1_140 = arith.constant 1 : index
    %c10_141 = arith.constant 10 : index
    %c0_142 = arith.constant 0 : index
    %584 = vector.load %arg3[%c1_140, %c10_141, %c0_142] : memref<4x16x2xf32, #tpu.memory_space<vmem>>, vector<1x1x2xf32>
    %585 = vector.shape_cast %584 : vector<1x1x2xf32> to vector<2xf32>
    %586 = vector.shape_cast %538 : vector<2xf32> to vector<1x1x2xf32>
    tpu.vector_store %arg3[%c1_140, %c10_141, %c0_142], %586 {strides = array<i32>} : memref<4x16x2xf32, #tpu.memory_space<vmem>>, vector<1x1x2xf32>,
    %c1_143 = arith.constant 1 : index
    %c11_144 = arith.constant 11 : index
    %c0_145 = arith.constant 0 : index
    %587 = vector.load %arg3[%c1_143, %c11_144, %c0_145] : memref<4x16x2xf32, #tpu.memory_space<vmem>>, vector<1x1x2xf32>
    %588 = vector.shape_cast %587 : vector<1x1x2xf32> to vector<2xf32>
    %589 = vector.shape_cast %389 : vector<2xf32> to vector<1x1x2xf32>
    tpu.vector_store %arg3[%c1_143, %c11_144, %c0_145], %589 {strides = array<i32>} : memref<4x16x2xf32, #tpu.memory_space<vmem>>, vector<1x1x2xf32>,
    %c1_146 = arith.constant 1 : index
    %c12_147 = arith.constant 12 : index
    %c0_148 = arith.constant 0 : index
    %590 = vector.load %arg3[%c1_146, %c12_147, %c0_148] : memref<4x16x2xf32, #tpu.memory_space<vmem>>, vector<1x1x2xf32>
    %591 = vector.shape_cast %590 : vector<1x1x2xf32> to vector<2xf32>
    %592 = vector.shape_cast %543 : vector<2xf32> to vector<1x1x2xf32>
    tpu.vector_store %arg3[%c1_146, %c12_147, %c0_148], %592 {strides = array<i32>} : memref<4x16x2xf32, #tpu.memory_space<vmem>>, vector<1x1x2xf32>,
    %c1_149 = arith.constant 1 : index
    %c13_150 = arith.constant 13 : index
    %c0_151 = arith.constant 0 : index
    %593 = vector.load %arg3[%c1_149, %c13_150, %c0_151] : memref<4x16x2xf32, #tpu.memory_space<vmem>>, vector<1x1x2xf32>
    %594 = vector.shape_cast %593 : vector<1x1x2xf32> to vector<2xf32>
    %595 = vector.shape_cast %548 : vector<2xf32> to vector<1x1x2xf32>
    tpu.vector_store %arg3[%c1_149, %c13_150, %c0_151], %595 {strides = array<i32>} : memref<4x16x2xf32, #tpu.memory_space<vmem>>, vector<1x1x2xf32>,
    %c1_152 = arith.constant 1 : index
    %c14_153 = arith.constant 14 : index
    %c0_154 = arith.constant 0 : index
    %596 = vector.load %arg3[%c1_152, %c14_153, %c0_154] : memref<4x16x2xf32, #tpu.memory_space<vmem>>, vector<1x1x2xf32>
    %597 = vector.shape_cast %596 : vector<1x1x2xf32> to vector<2xf32>
    %598 = vector.shape_cast %553 : vector<2xf32> to vector<1x1x2xf32>
    tpu.vector_store %arg3[%c1_152, %c14_153, %c0_154], %598 {strides = array<i32>} : memref<4x16x2xf32, #tpu.memory_space<vmem>>, vector<1x1x2xf32>,
    %c1_155 = arith.constant 1 : index
    %c15_156 = arith.constant 15 : index
    %c0_157 = arith.constant 0 : index
    %599 = vector.load %arg3[%c1_155, %c15_156, %c0_157] : memref<4x16x2xf32, #tpu.memory_space<vmem>>, vector<1x1x2xf32>
    %600 = vector.shape_cast %599 : vector<1x1x2xf32> to vector<2xf32>
    %601 = vector.shape_cast %433 : vector<2xf32> to vector<1x1x2xf32>
    tpu.vector_store %arg3[%c1_155, %c15_156, %c0_157], %601 {strides = array<i32>} : memref<4x16x2xf32, #tpu.memory_space<vmem>>, vector<1x1x2xf32>,
    %c2_158 = arith.constant 2 : index
    %c0_159 = arith.constant 0 : index
    %602 = memref.load %arg1[%c2_158, %c0_159] : memref<4x24xf32, #tpu.memory_space<smem>>
    %c2_160 = arith.constant 2 : index
    %c1_161 = arith.constant 1 : index
    %603 = memref.load %arg1[%c2_160, %c1_161] : memref<4x24xf32, #tpu.memory_space<smem>>
    %c2_162 = arith.constant 2 : index
    %c2_163 = arith.constant 2 : index
    %604 = memref.load %arg1[%c2_162, %c2_163] : memref<4x24xf32, #tpu.memory_space<smem>>
    %c2_164 = arith.constant 2 : index
    %c3_165 = arith.constant 3 : index
    %605 = memref.load %arg1[%c2_164, %c3_165] : memref<4x24xf32, #tpu.memory_space<smem>>
    %c2_166 = arith.constant 2 : index
    %c4_167 = arith.constant 4 : index
    %606 = memref.load %arg1[%c2_166, %c4_167] : memref<4x24xf32, #tpu.memory_space<smem>>
    %c2_168 = arith.constant 2 : index
    %c5_169 = arith.constant 5 : index
    %607 = memref.load %arg1[%c2_168, %c5_169] : memref<4x24xf32, #tpu.memory_space<smem>>
    %c2_170 = arith.constant 2 : index
    %c6_171 = arith.constant 6 : index
    %608 = memref.load %arg1[%c2_170, %c6_171] : memref<4x24xf32, #tpu.memory_space<smem>>
    %c2_172 = arith.constant 2 : index
    %c7_173 = arith.constant 7 : index
    %609 = memref.load %arg1[%c2_172, %c7_173] : memref<4x24xf32, #tpu.memory_space<smem>>
    %c2_174 = arith.constant 2 : index
    %c8_175 = arith.constant 8 : index
    %610 = memref.load %arg1[%c2_174, %c8_175] : memref<4x24xf32, #tpu.memory_space<smem>>
    %c2_176 = arith.constant 2 : index
    %c9_177 = arith.constant 9 : index
    %611 = memref.load %arg1[%c2_176, %c9_177] : memref<4x24xf32, #tpu.memory_space<smem>>
    %c2_178 = arith.constant 2 : index
    %c10_179 = arith.constant 10 : index
    %612 = memref.load %arg1[%c2_178, %c10_179] : memref<4x24xf32, #tpu.memory_space<smem>>
    %c2_180 = arith.constant 2 : index
    %c11_181 = arith.constant 11 : index
    %613 = memref.load %arg1[%c2_180, %c11_181] : memref<4x24xf32, #tpu.memory_space<smem>>
    %c2_182 = arith.constant 2 : index
    %c12_183 = arith.constant 12 : index
    %614 = memref.load %arg1[%c2_182, %c12_183] : memref<4x24xf32, #tpu.memory_space<smem>>
    %c2_184 = arith.constant 2 : index
    %c13_185 = arith.constant 13 : index
    %615 = memref.load %arg1[%c2_184, %c13_185] : memref<4x24xf32, #tpu.memory_space<smem>>
    %c2_186 = arith.constant 2 : index
    %c14_187 = arith.constant 14 : index
    %616 = memref.load %arg1[%c2_186, %c14_187] : memref<4x24xf32, #tpu.memory_space<smem>>
    %c2_188 = arith.constant 2 : index
    %c15_189 = arith.constant 15 : index
    %617 = memref.load %arg1[%c2_188, %c15_189] : memref<4x24xf32, #tpu.memory_space<smem>>
    %618 = vector.broadcast %602 : f32 to vector<2xf32>
    %619 = arith.mulf %498, %618 : vector<2xf32>
    %620 = vector.broadcast %606 : f32 to vector<2xf32>
    %621 = arith.mulf %503, %620 : vector<2xf32>
    %622 = arith.addf %619, %621 : vector<2xf32>
    %623 = vector.broadcast %610 : f32 to vector<2xf32>
    %624 = arith.mulf %508, %623 : vector<2xf32>
    %625 = arith.addf %622, %624 : vector<2xf32>
    %626 = vector.broadcast %614 : f32 to vector<2xf32>
    %627 = arith.mulf %301, %626 : vector<2xf32>
    %628 = arith.addf %625, %627 : vector<2xf32>
    %629 = vector.broadcast %603 : f32 to vector<2xf32>
    %630 = arith.mulf %498, %629 : vector<2xf32>
    %631 = vector.broadcast %607 : f32 to vector<2xf32>
    %632 = arith.mulf %503, %631 : vector<2xf32>
    %633 = arith.addf %630, %632 : vector<2xf32>
    %634 = vector.broadcast %611 : f32 to vector<2xf32>
    %635 = arith.mulf %508, %634 : vector<2xf32>
    %636 = arith.addf %633, %635 : vector<2xf32>
    %637 = vector.broadcast %615 : f32 to vector<2xf32>
    %638 = arith.mulf %301, %637 : vector<2xf32>
    %639 = arith.addf %636, %638 : vector<2xf32>
    %640 = vector.broadcast %604 : f32 to vector<2xf32>
    %641 = arith.mulf %498, %640 : vector<2xf32>
    %642 = vector.broadcast %608 : f32 to vector<2xf32>
    %643 = arith.mulf %503, %642 : vector<2xf32>
    %644 = arith.addf %641, %643 : vector<2xf32>
    %645 = vector.broadcast %612 : f32 to vector<2xf32>
    %646 = arith.mulf %508, %645 : vector<2xf32>
    %647 = arith.addf %644, %646 : vector<2xf32>
    %648 = vector.broadcast %616 : f32 to vector<2xf32>
    %649 = arith.mulf %301, %648 : vector<2xf32>
    %650 = arith.addf %647, %649 : vector<2xf32>
    %651 = vector.broadcast %605 : f32 to vector<2xf32>
    %652 = arith.mulf %498, %651 : vector<2xf32>
    %653 = vector.broadcast %609 : f32 to vector<2xf32>
    %654 = arith.mulf %503, %653 : vector<2xf32>
    %655 = arith.addf %652, %654 : vector<2xf32>
    %656 = vector.broadcast %613 : f32 to vector<2xf32>
    %657 = arith.mulf %508, %656 : vector<2xf32>
    %658 = arith.addf %655, %657 : vector<2xf32>
    %659 = vector.broadcast %617 : f32 to vector<2xf32>
    %660 = arith.mulf %301, %659 : vector<2xf32>
    %661 = arith.addf %658, %660 : vector<2xf32>
    %662 = vector.broadcast %602 : f32 to vector<2xf32>
    %663 = arith.mulf %513, %662 : vector<2xf32>
    %664 = vector.broadcast %606 : f32 to vector<2xf32>
    %665 = arith.mulf %518, %664 : vector<2xf32>
    %666 = arith.addf %663, %665 : vector<2xf32>
    %667 = vector.broadcast %610 : f32 to vector<2xf32>
    %668 = arith.mulf %523, %667 : vector<2xf32>
    %669 = arith.addf %666, %668 : vector<2xf32>
    %670 = vector.broadcast %614 : f32 to vector<2xf32>
    %671 = arith.mulf %345, %670 : vector<2xf32>
    %672 = arith.addf %669, %671 : vector<2xf32>
    %673 = vector.broadcast %603 : f32 to vector<2xf32>
    %674 = arith.mulf %513, %673 : vector<2xf32>
    %675 = vector.broadcast %607 : f32 to vector<2xf32>
    %676 = arith.mulf %518, %675 : vector<2xf32>
    %677 = arith.addf %674, %676 : vector<2xf32>
    %678 = vector.broadcast %611 : f32 to vector<2xf32>
    %679 = arith.mulf %523, %678 : vector<2xf32>
    %680 = arith.addf %677, %679 : vector<2xf32>
    %681 = vector.broadcast %615 : f32 to vector<2xf32>
    %682 = arith.mulf %345, %681 : vector<2xf32>
    %683 = arith.addf %680, %682 : vector<2xf32>
    %684 = vector.broadcast %604 : f32 to vector<2xf32>
    %685 = arith.mulf %513, %684 : vector<2xf32>
    %686 = vector.broadcast %608 : f32 to vector<2xf32>
    %687 = arith.mulf %518, %686 : vector<2xf32>
    %688 = arith.addf %685, %687 : vector<2xf32>
    %689 = vector.broadcast %612 : f32 to vector<2xf32>
    %690 = arith.mulf %523, %689 : vector<2xf32>
    %691 = arith.addf %688, %690 : vector<2xf32>
    %692 = vector.broadcast %616 : f32 to vector<2xf32>
    %693 = arith.mulf %345, %692 : vector<2xf32>
    %694 = arith.addf %691, %693 : vector<2xf32>
    %695 = vector.broadcast %605 : f32 to vector<2xf32>
    %696 = arith.mulf %513, %695 : vector<2xf32>
    %697 = vector.broadcast %609 : f32 to vector<2xf32>
    %698 = arith.mulf %518, %697 : vector<2xf32>
    %699 = arith.addf %696, %698 : vector<2xf32>
    %700 = vector.broadcast %613 : f32 to vector<2xf32>
    %701 = arith.mulf %523, %700 : vector<2xf32>
    %702 = arith.addf %699, %701 : vector<2xf32>
    %703 = vector.broadcast %617 : f32 to vector<2xf32>
    %704 = arith.mulf %345, %703 : vector<2xf32>
    %705 = arith.addf %702, %704 : vector<2xf32>
    %706 = vector.broadcast %602 : f32 to vector<2xf32>
    %707 = arith.mulf %528, %706 : vector<2xf32>
    %708 = vector.broadcast %606 : f32 to vector<2xf32>
    %709 = arith.mulf %533, %708 : vector<2xf32>
    %710 = arith.addf %707, %709 : vector<2xf32>
    %711 = vector.broadcast %610 : f32 to vector<2xf32>
    %712 = arith.mulf %538, %711 : vector<2xf32>
    %713 = arith.addf %710, %712 : vector<2xf32>
    %714 = vector.broadcast %614 : f32 to vector<2xf32>
    %715 = arith.mulf %389, %714 : vector<2xf32>
    %716 = arith.addf %713, %715 : vector<2xf32>
    %717 = vector.broadcast %603 : f32 to vector<2xf32>
    %718 = arith.mulf %528, %717 : vector<2xf32>
    %719 = vector.broadcast %607 : f32 to vector<2xf32>
    %720 = arith.mulf %533, %719 : vector<2xf32>
    %721 = arith.addf %718, %720 : vector<2xf32>
    %722 = vector.broadcast %611 : f32 to vector<2xf32>
    %723 = arith.mulf %538, %722 : vector<2xf32>
    %724 = arith.addf %721, %723 : vector<2xf32>
    %725 = vector.broadcast %615 : f32 to vector<2xf32>
    %726 = arith.mulf %389, %725 : vector<2xf32>
    %727 = arith.addf %724, %726 : vector<2xf32>
    %728 = vector.broadcast %604 : f32 to vector<2xf32>
    %729 = arith.mulf %528, %728 : vector<2xf32>
    %730 = vector.broadcast %608 : f32 to vector<2xf32>
    %731 = arith.mulf %533, %730 : vector<2xf32>
    %732 = arith.addf %729, %731 : vector<2xf32>
    %733 = vector.broadcast %612 : f32 to vector<2xf32>
    %734 = arith.mulf %538, %733 : vector<2xf32>
    %735 = arith.addf %732, %734 : vector<2xf32>
    %736 = vector.broadcast %616 : f32 to vector<2xf32>
    %737 = arith.mulf %389, %736 : vector<2xf32>
    %738 = arith.addf %735, %737 : vector<2xf32>
    %739 = vector.broadcast %605 : f32 to vector<2xf32>
    %740 = arith.mulf %528, %739 : vector<2xf32>
    %741 = vector.broadcast %609 : f32 to vector<2xf32>
    %742 = arith.mulf %533, %741 : vector<2xf32>
    %743 = arith.addf %740, %742 : vector<2xf32>
    %744 = vector.broadcast %613 : f32 to vector<2xf32>
    %745 = arith.mulf %538, %744 : vector<2xf32>
    %746 = arith.addf %743, %745 : vector<2xf32>
    %747 = vector.broadcast %617 : f32 to vector<2xf32>
    %748 = arith.mulf %389, %747 : vector<2xf32>
    %749 = arith.addf %746, %748 : vector<2xf32>
    %750 = vector.broadcast %602 : f32 to vector<2xf32>
    %751 = arith.mulf %543, %750 : vector<2xf32>
    %752 = vector.broadcast %606 : f32 to vector<2xf32>
    %753 = arith.mulf %548, %752 : vector<2xf32>
    %754 = arith.addf %751, %753 : vector<2xf32>
    %755 = vector.broadcast %610 : f32 to vector<2xf32>
    %756 = arith.mulf %553, %755 : vector<2xf32>
    %757 = arith.addf %754, %756 : vector<2xf32>
    %758 = vector.broadcast %614 : f32 to vector<2xf32>
    %759 = arith.mulf %433, %758 : vector<2xf32>
    %760 = arith.addf %757, %759 : vector<2xf32>
    %761 = vector.broadcast %603 : f32 to vector<2xf32>
    %762 = arith.mulf %543, %761 : vector<2xf32>
    %763 = vector.broadcast %607 : f32 to vector<2xf32>
    %764 = arith.mulf %548, %763 : vector<2xf32>
    %765 = arith.addf %762, %764 : vector<2xf32>
    %766 = vector.broadcast %611 : f32 to vector<2xf32>
    %767 = arith.mulf %553, %766 : vector<2xf32>
    %768 = arith.addf %765, %767 : vector<2xf32>
    %769 = vector.broadcast %615 : f32 to vector<2xf32>
    %770 = arith.mulf %433, %769 : vector<2xf32>
    %771 = arith.addf %768, %770 : vector<2xf32>
    %772 = vector.broadcast %604 : f32 to vector<2xf32>
    %773 = arith.mulf %543, %772 : vector<2xf32>
    %774 = vector.broadcast %608 : f32 to vector<2xf32>
    %775 = arith.mulf %548, %774 : vector<2xf32>
    %776 = arith.addf %773, %775 : vector<2xf32>
    %777 = vector.broadcast %612 : f32 to vector<2xf32>
    %778 = arith.mulf %553, %777 : vector<2xf32>
    %779 = arith.addf %776, %778 : vector<2xf32>
    %780 = vector.broadcast %616 : f32 to vector<2xf32>
    %781 = arith.mulf %433, %780 : vector<2xf32>
    %782 = arith.addf %779, %781 : vector<2xf32>
    %783 = vector.broadcast %605 : f32 to vector<2xf32>
    %784 = arith.mulf %543, %783 : vector<2xf32>
    %785 = vector.broadcast %609 : f32 to vector<2xf32>
    %786 = arith.mulf %548, %785 : vector<2xf32>
    %787 = arith.addf %784, %786 : vector<2xf32>
    %788 = vector.broadcast %613 : f32 to vector<2xf32>
    %789 = arith.mulf %553, %788 : vector<2xf32>
    %790 = arith.addf %787, %789 : vector<2xf32>
    %791 = vector.broadcast %617 : f32 to vector<2xf32>
    %792 = arith.mulf %433, %791 : vector<2xf32>
    %793 = arith.addf %790, %792 : vector<2xf32>
    %c2_190 = arith.constant 2 : index
    %c0_191 = arith.constant 0 : index
    %c0_192 = arith.constant 0 : index
    %794 = vector.load %arg2[%c2_190, %c0_191, %c0_192] : memref<4x4x2xf32, #tpu.memory_space<vmem>>, vector<1x1x2xf32>
    %795 = vector.shape_cast %794 : vector<1x1x2xf32> to vector<2xf32>
    %c2_193 = arith.constant 2 : index
    %c20 = arith.constant 20 : index
    %796 = memref.load %arg1[%c2_193, %c20] : memref<4x24xf32, #tpu.memory_space<smem>>
    %797 = vector.broadcast %796 : f32 to vector<2xf32>
    %798 = arith.mulf %795, %797 : vector<2xf32>
    %c2_194 = arith.constant 2 : index
    %c21 = arith.constant 21 : index
    %799 = memref.load %arg1[%c2_194, %c21] : memref<4x24xf32, #tpu.memory_space<smem>>
    %800 = vector.broadcast %799 : f32 to vector<2xf32>
    %801 = arith.mulf %795, %800 : vector<2xf32>
    %c2_195 = arith.constant 2 : index
    %c22 = arith.constant 22 : index
    %802 = memref.load %arg1[%c2_195, %c22] : memref<4x24xf32, #tpu.memory_space<smem>>
    %803 = vector.broadcast %802 : f32 to vector<2xf32>
    %804 = arith.mulf %795, %803 : vector<2xf32>
    %805 = arith.mulf %628, %798 : vector<2xf32>
    %806 = arith.mulf %639, %801 : vector<2xf32>
    %807 = arith.addf %805, %806 : vector<2xf32>
    %808 = arith.mulf %650, %804 : vector<2xf32>
    %809 = arith.addf %807, %808 : vector<2xf32>
    %810 = arith.addf %809, %661 : vector<2xf32>
    %811 = arith.mulf %672, %798 : vector<2xf32>
    %812 = arith.mulf %683, %801 : vector<2xf32>
    %813 = arith.addf %811, %812 : vector<2xf32>
    %814 = arith.mulf %694, %804 : vector<2xf32>
    %815 = arith.addf %813, %814 : vector<2xf32>
    %816 = arith.addf %815, %705 : vector<2xf32>
    %817 = arith.mulf %716, %798 : vector<2xf32>
    %818 = arith.mulf %727, %801 : vector<2xf32>
    %819 = arith.addf %817, %818 : vector<2xf32>
    %820 = arith.mulf %738, %804 : vector<2xf32>
    %821 = arith.addf %819, %820 : vector<2xf32>
    %822 = arith.addf %821, %749 : vector<2xf32>
    %823 = arith.mulf %760, %798 : vector<2xf32>
    %824 = arith.mulf %771, %801 : vector<2xf32>
    %825 = arith.addf %823, %824 : vector<2xf32>
    %826 = arith.mulf %782, %804 : vector<2xf32>
    %827 = arith.addf %825, %826 : vector<2xf32>
    %828 = arith.addf %827, %793 : vector<2xf32>
    %c2_196 = arith.constant 2 : index
    %c0_197 = arith.constant 0 : index
    %c0_198 = arith.constant 0 : index
    %829 = vector.load %arg3[%c2_196, %c0_197, %c0_198] : memref<4x16x2xf32, #tpu.memory_space<vmem>>, vector<1x1x2xf32>
    %830 = vector.shape_cast %829 : vector<1x1x2xf32> to vector<2xf32>
    %831 = vector.shape_cast %628 : vector<2xf32> to vector<1x1x2xf32>
    tpu.vector_store %arg3[%c2_196, %c0_197, %c0_198], %831 {strides = array<i32>} : memref<4x16x2xf32, #tpu.memory_space<vmem>>, vector<1x1x2xf32>,
    %c2_199 = arith.constant 2 : index
    %c1_200 = arith.constant 1 : index
    %c0_201 = arith.constant 0 : index
    %832 = vector.load %arg3[%c2_199, %c1_200, %c0_201] : memref<4x16x2xf32, #tpu.memory_space<vmem>>, vector<1x1x2xf32>
    %833 = vector.shape_cast %832 : vector<1x1x2xf32> to vector<2xf32>
    %834 = vector.shape_cast %639 : vector<2xf32> to vector<1x1x2xf32>
    tpu.vector_store %arg3[%c2_199, %c1_200, %c0_201], %834 {strides = array<i32>} : memref<4x16x2xf32, #tpu.memory_space<vmem>>, vector<1x1x2xf32>,
    %c2_202 = arith.constant 2 : index
    %c2_203 = arith.constant 2 : index
    %c0_204 = arith.constant 0 : index
    %835 = vector.load %arg3[%c2_202, %c2_203, %c0_204] : memref<4x16x2xf32, #tpu.memory_space<vmem>>, vector<1x1x2xf32>
    %836 = vector.shape_cast %835 : vector<1x1x2xf32> to vector<2xf32>
    %837 = vector.shape_cast %650 : vector<2xf32> to vector<1x1x2xf32>
    tpu.vector_store %arg3[%c2_202, %c2_203, %c0_204], %837 {strides = array<i32>} : memref<4x16x2xf32, #tpu.memory_space<vmem>>, vector<1x1x2xf32>,
    %c2_205 = arith.constant 2 : index
    %c3_206 = arith.constant 3 : index
    %c0_207 = arith.constant 0 : index
    %838 = vector.load %arg3[%c2_205, %c3_206, %c0_207] : memref<4x16x2xf32, #tpu.memory_space<vmem>>, vector<1x1x2xf32>
    %839 = vector.shape_cast %838 : vector<1x1x2xf32> to vector<2xf32>
    %840 = vector.shape_cast %810 : vector<2xf32> to vector<1x1x2xf32>
    tpu.vector_store %arg3[%c2_205, %c3_206, %c0_207], %840 {strides = array<i32>} : memref<4x16x2xf32, #tpu.memory_space<vmem>>, vector<1x1x2xf32>,
    %c2_208 = arith.constant 2 : index
    %c4_209 = arith.constant 4 : index
    %c0_210 = arith.constant 0 : index
    %841 = vector.load %arg3[%c2_208, %c4_209, %c0_210] : memref<4x16x2xf32, #tpu.memory_space<vmem>>, vector<1x1x2xf32>
    %842 = vector.shape_cast %841 : vector<1x1x2xf32> to vector<2xf32>
    %843 = vector.shape_cast %672 : vector<2xf32> to vector<1x1x2xf32>
    tpu.vector_store %arg3[%c2_208, %c4_209, %c0_210], %843 {strides = array<i32>} : memref<4x16x2xf32, #tpu.memory_space<vmem>>, vector<1x1x2xf32>,
    %c2_211 = arith.constant 2 : index
    %c5_212 = arith.constant 5 : index
    %c0_213 = arith.constant 0 : index
    %844 = vector.load %arg3[%c2_211, %c5_212, %c0_213] : memref<4x16x2xf32, #tpu.memory_space<vmem>>, vector<1x1x2xf32>
    %845 = vector.shape_cast %844 : vector<1x1x2xf32> to vector<2xf32>
    %846 = vector.shape_cast %683 : vector<2xf32> to vector<1x1x2xf32>
    tpu.vector_store %arg3[%c2_211, %c5_212, %c0_213], %846 {strides = array<i32>} : memref<4x16x2xf32, #tpu.memory_space<vmem>>, vector<1x1x2xf32>,
    %c2_214 = arith.constant 2 : index
    %c6_215 = arith.constant 6 : index
    %c0_216 = arith.constant 0 : index
    %847 = vector.load %arg3[%c2_214, %c6_215, %c0_216] : memref<4x16x2xf32, #tpu.memory_space<vmem>>, vector<1x1x2xf32>
    %848 = vector.shape_cast %847 : vector<1x1x2xf32> to vector<2xf32>
    %849 = vector.shape_cast %694 : vector<2xf32> to vector<1x1x2xf32>
    tpu.vector_store %arg3[%c2_214, %c6_215, %c0_216], %849 {strides = array<i32>} : memref<4x16x2xf32, #tpu.memory_space<vmem>>, vector<1x1x2xf32>,
    %c2_217 = arith.constant 2 : index
    %c7_218 = arith.constant 7 : index
    %c0_219 = arith.constant 0 : index
    %850 = vector.load %arg3[%c2_217, %c7_218, %c0_219] : memref<4x16x2xf32, #tpu.memory_space<vmem>>, vector<1x1x2xf32>
    %851 = vector.shape_cast %850 : vector<1x1x2xf32> to vector<2xf32>
    %852 = vector.shape_cast %816 : vector<2xf32> to vector<1x1x2xf32>
    tpu.vector_store %arg3[%c2_217, %c7_218, %c0_219], %852 {strides = array<i32>} : memref<4x16x2xf32, #tpu.memory_space<vmem>>, vector<1x1x2xf32>,
    %c2_220 = arith.constant 2 : index
    %c8_221 = arith.constant 8 : index
    %c0_222 = arith.constant 0 : index
    %853 = vector.load %arg3[%c2_220, %c8_221, %c0_222] : memref<4x16x2xf32, #tpu.memory_space<vmem>>, vector<1x1x2xf32>
    %854 = vector.shape_cast %853 : vector<1x1x2xf32> to vector<2xf32>
    %855 = vector.shape_cast %716 : vector<2xf32> to vector<1x1x2xf32>
    tpu.vector_store %arg3[%c2_220, %c8_221, %c0_222], %855 {strides = array<i32>} : memref<4x16x2xf32, #tpu.memory_space<vmem>>, vector<1x1x2xf32>,
    %c2_223 = arith.constant 2 : index
    %c9_224 = arith.constant 9 : index
    %c0_225 = arith.constant 0 : index
    %856 = vector.load %arg3[%c2_223, %c9_224, %c0_225] : memref<4x16x2xf32, #tpu.memory_space<vmem>>, vector<1x1x2xf32>
    %857 = vector.shape_cast %856 : vector<1x1x2xf32> to vector<2xf32>
    %858 = vector.shape_cast %727 : vector<2xf32> to vector<1x1x2xf32>
    tpu.vector_store %arg3[%c2_223, %c9_224, %c0_225], %858 {strides = array<i32>} : memref<4x16x2xf32, #tpu.memory_space<vmem>>, vector<1x1x2xf32>,
    %c2_226 = arith.constant 2 : index
    %c10_227 = arith.constant 10 : index
    %c0_228 = arith.constant 0 : index
    %859 = vector.load %arg3[%c2_226, %c10_227, %c0_228] : memref<4x16x2xf32, #tpu.memory_space<vmem>>, vector<1x1x2xf32>
    %860 = vector.shape_cast %859 : vector<1x1x2xf32> to vector<2xf32>
    %861 = vector.shape_cast %738 : vector<2xf32> to vector<1x1x2xf32>
    tpu.vector_store %arg3[%c2_226, %c10_227, %c0_228], %861 {strides = array<i32>} : memref<4x16x2xf32, #tpu.memory_space<vmem>>, vector<1x1x2xf32>,
    %c2_229 = arith.constant 2 : index
    %c11_230 = arith.constant 11 : index
    %c0_231 = arith.constant 0 : index
    %862 = vector.load %arg3[%c2_229, %c11_230, %c0_231] : memref<4x16x2xf32, #tpu.memory_space<vmem>>, vector<1x1x2xf32>
    %863 = vector.shape_cast %862 : vector<1x1x2xf32> to vector<2xf32>
    %864 = vector.shape_cast %822 : vector<2xf32> to vector<1x1x2xf32>
    tpu.vector_store %arg3[%c2_229, %c11_230, %c0_231], %864 {strides = array<i32>} : memref<4x16x2xf32, #tpu.memory_space<vmem>>, vector<1x1x2xf32>,
    %c2_232 = arith.constant 2 : index
    %c12_233 = arith.constant 12 : index
    %c0_234 = arith.constant 0 : index
    %865 = vector.load %arg3[%c2_232, %c12_233, %c0_234] : memref<4x16x2xf32, #tpu.memory_space<vmem>>, vector<1x1x2xf32>
    %866 = vector.shape_cast %865 : vector<1x1x2xf32> to vector<2xf32>
    %867 = vector.shape_cast %760 : vector<2xf32> to vector<1x1x2xf32>
    tpu.vector_store %arg3[%c2_232, %c12_233, %c0_234], %867 {strides = array<i32>} : memref<4x16x2xf32, #tpu.memory_space<vmem>>, vector<1x1x2xf32>,
    %c2_235 = arith.constant 2 : index
    %c13_236 = arith.constant 13 : index
    %c0_237 = arith.constant 0 : index
    %868 = vector.load %arg3[%c2_235, %c13_236, %c0_237] : memref<4x16x2xf32, #tpu.memory_space<vmem>>, vector<1x1x2xf32>
    %869 = vector.shape_cast %868 : vector<1x1x2xf32> to vector<2xf32>
    %870 = vector.shape_cast %771 : vector<2xf32> to vector<1x1x2xf32>
    tpu.vector_store %arg3[%c2_235, %c13_236, %c0_237], %870 {strides = array<i32>} : memref<4x16x2xf32, #tpu.memory_space<vmem>>, vector<1x1x2xf32>,
    %c2_238 = arith.constant 2 : index
    %c14_239 = arith.constant 14 : index
    %c0_240 = arith.constant 0 : index
    %871 = vector.load %arg3[%c2_238, %c14_239, %c0_240] : memref<4x16x2xf32, #tpu.memory_space<vmem>>, vector<1x1x2xf32>
    %872 = vector.shape_cast %871 : vector<1x1x2xf32> to vector<2xf32>
    %873 = vector.shape_cast %782 : vector<2xf32> to vector<1x1x2xf32>
    tpu.vector_store %arg3[%c2_238, %c14_239, %c0_240], %873 {strides = array<i32>} : memref<4x16x2xf32, #tpu.memory_space<vmem>>, vector<1x1x2xf32>,
    %c2_241 = arith.constant 2 : index
    %c15_242 = arith.constant 15 : index
    %c0_243 = arith.constant 0 : index
    %874 = vector.load %arg3[%c2_241, %c15_242, %c0_243] : memref<4x16x2xf32, #tpu.memory_space<vmem>>, vector<1x1x2xf32>
    %875 = vector.shape_cast %874 : vector<1x1x2xf32> to vector<2xf32>
    %876 = vector.shape_cast %828 : vector<2xf32> to vector<1x1x2xf32>
    tpu.vector_store %arg3[%c2_241, %c15_242, %c0_243], %876 {strides = array<i32>} : memref<4x16x2xf32, #tpu.memory_space<vmem>>, vector<1x1x2xf32>,
    %c3_244 = arith.constant 3 : index
    %c0_245 = arith.constant 0 : index
    %c0_246 = arith.constant 0 : index
    %877 = vector.load %arg3[%c3_244, %c0_245, %c0_246] : memref<4x16x2xf32, #tpu.memory_space<vmem>>, vector<1x1x2xf32>
    %878 = vector.shape_cast %877 : vector<1x1x2xf32> to vector<2xf32>
    %879 = vector.shape_cast %628 : vector<2xf32> to vector<1x1x2xf32>
    tpu.vector_store %arg3[%c3_244, %c0_245, %c0_246], %879 {strides = array<i32>} : memref<4x16x2xf32, #tpu.memory_space<vmem>>, vector<1x1x2xf32>,
    %c3_247 = arith.constant 3 : index
    %c1_248 = arith.constant 1 : index
    %c0_249 = arith.constant 0 : index
    %880 = vector.load %arg3[%c3_247, %c1_248, %c0_249] : memref<4x16x2xf32, #tpu.memory_space<vmem>>, vector<1x1x2xf32>
    %881 = vector.shape_cast %880 : vector<1x1x2xf32> to vector<2xf32>
    %882 = vector.shape_cast %639 : vector<2xf32> to vector<1x1x2xf32>
    tpu.vector_store %arg3[%c3_247, %c1_248, %c0_249], %882 {strides = array<i32>} : memref<4x16x2xf32, #tpu.memory_space<vmem>>, vector<1x1x2xf32>,
    %c3_250 = arith.constant 3 : index
    %c2_251 = arith.constant 2 : index
    %c0_252 = arith.constant 0 : index
    %883 = vector.load %arg3[%c3_250, %c2_251, %c0_252] : memref<4x16x2xf32, #tpu.memory_space<vmem>>, vector<1x1x2xf32>
    %884 = vector.shape_cast %883 : vector<1x1x2xf32> to vector<2xf32>
    %885 = vector.shape_cast %650 : vector<2xf32> to vector<1x1x2xf32>
    tpu.vector_store %arg3[%c3_250, %c2_251, %c0_252], %885 {strides = array<i32>} : memref<4x16x2xf32, #tpu.memory_space<vmem>>, vector<1x1x2xf32>,
    %c3_253 = arith.constant 3 : index
    %c3_254 = arith.constant 3 : index
    %c0_255 = arith.constant 0 : index
    %886 = vector.load %arg3[%c3_253, %c3_254, %c0_255] : memref<4x16x2xf32, #tpu.memory_space<vmem>>, vector<1x1x2xf32>
    %887 = vector.shape_cast %886 : vector<1x1x2xf32> to vector<2xf32>
    %888 = vector.shape_cast %810 : vector<2xf32> to vector<1x1x2xf32>
    tpu.vector_store %arg3[%c3_253, %c3_254, %c0_255], %888 {strides = array<i32>} : memref<4x16x2xf32, #tpu.memory_space<vmem>>, vector<1x1x2xf32>,
    %c3_256 = arith.constant 3 : index
    %c4_257 = arith.constant 4 : index
    %c0_258 = arith.constant 0 : index
    %889 = vector.load %arg3[%c3_256, %c4_257, %c0_258] : memref<4x16x2xf32, #tpu.memory_space<vmem>>, vector<1x1x2xf32>
    %890 = vector.shape_cast %889 : vector<1x1x2xf32> to vector<2xf32>
    %891 = vector.shape_cast %672 : vector<2xf32> to vector<1x1x2xf32>
    tpu.vector_store %arg3[%c3_256, %c4_257, %c0_258], %891 {strides = array<i32>} : memref<4x16x2xf32, #tpu.memory_space<vmem>>, vector<1x1x2xf32>,
    %c3_259 = arith.constant 3 : index
    %c5_260 = arith.constant 5 : index
    %c0_261 = arith.constant 0 : index
    %892 = vector.load %arg3[%c3_259, %c5_260, %c0_261] : memref<4x16x2xf32, #tpu.memory_space<vmem>>, vector<1x1x2xf32>
    %893 = vector.shape_cast %892 : vector<1x1x2xf32> to vector<2xf32>
    %894 = vector.shape_cast %683 : vector<2xf32> to vector<1x1x2xf32>
    tpu.vector_store %arg3[%c3_259, %c5_260, %c0_261], %894 {strides = array<i32>} : memref<4x16x2xf32, #tpu.memory_space<vmem>>, vector<1x1x2xf32>,
    %c3_262 = arith.constant 3 : index
    %c6_263 = arith.constant 6 : index
    %c0_264 = arith.constant 0 : index
    %895 = vector.load %arg3[%c3_262, %c6_263, %c0_264] : memref<4x16x2xf32, #tpu.memory_space<vmem>>, vector<1x1x2xf32>
    %896 = vector.shape_cast %895 : vector<1x1x2xf32> to vector<2xf32>
    %897 = vector.shape_cast %694 : vector<2xf32> to vector<1x1x2xf32>
    tpu.vector_store %arg3[%c3_262, %c6_263, %c0_264], %897 {strides = array<i32>} : memref<4x16x2xf32, #tpu.memory_space<vmem>>, vector<1x1x2xf32>,
    %c3_265 = arith.constant 3 : index
    %c7_266 = arith.constant 7 : index
    %c0_267 = arith.constant 0 : index
    %898 = vector.load %arg3[%c3_265, %c7_266, %c0_267] : memref<4x16x2xf32, #tpu.memory_space<vmem>>, vector<1x1x2xf32>
    %899 = vector.shape_cast %898 : vector<1x1x2xf32> to vector<2xf32>
    %900 = vector.shape_cast %816 : vector<2xf32> to vector<1x1x2xf32>
    tpu.vector_store %arg3[%c3_265, %c7_266, %c0_267], %900 {strides = array<i32>} : memref<4x16x2xf32, #tpu.memory_space<vmem>>, vector<1x1x2xf32>,
    %c3_268 = arith.constant 3 : index
    %c8_269 = arith.constant 8 : index
    %c0_270 = arith.constant 0 : index
    %901 = vector.load %arg3[%c3_268, %c8_269, %c0_270] : memref<4x16x2xf32, #tpu.memory_space<vmem>>, vector<1x1x2xf32>
    %902 = vector.shape_cast %901 : vector<1x1x2xf32> to vector<2xf32>
    %903 = vector.shape_cast %716 : vector<2xf32> to vector<1x1x2xf32>
    tpu.vector_store %arg3[%c3_268, %c8_269, %c0_270], %903 {strides = array<i32>} : memref<4x16x2xf32, #tpu.memory_space<vmem>>, vector<1x1x2xf32>,
    %c3_271 = arith.constant 3 : index
    %c9_272 = arith.constant 9 : index
    %c0_273 = arith.constant 0 : index
    %904 = vector.load %arg3[%c3_271, %c9_272, %c0_273] : memref<4x16x2xf32, #tpu.memory_space<vmem>>, vector<1x1x2xf32>
    %905 = vector.shape_cast %904 : vector<1x1x2xf32> to vector<2xf32>
    %906 = vector.shape_cast %727 : vector<2xf32> to vector<1x1x2xf32>
    tpu.vector_store %arg3[%c3_271, %c9_272, %c0_273], %906 {strides = array<i32>} : memref<4x16x2xf32, #tpu.memory_space<vmem>>, vector<1x1x2xf32>,
    %c3_274 = arith.constant 3 : index
    %c10_275 = arith.constant 10 : index
    %c0_276 = arith.constant 0 : index
    %907 = vector.load %arg3[%c3_274, %c10_275, %c0_276] : memref<4x16x2xf32, #tpu.memory_space<vmem>>, vector<1x1x2xf32>
    %908 = vector.shape_cast %907 : vector<1x1x2xf32> to vector<2xf32>
    %909 = vector.shape_cast %738 : vector<2xf32> to vector<1x1x2xf32>
    tpu.vector_store %arg3[%c3_274, %c10_275, %c0_276], %909 {strides = array<i32>} : memref<4x16x2xf32, #tpu.memory_space<vmem>>, vector<1x1x2xf32>,
    %c3_277 = arith.constant 3 : index
    %c11_278 = arith.constant 11 : index
    %c0_279 = arith.constant 0 : index
    %910 = vector.load %arg3[%c3_277, %c11_278, %c0_279] : memref<4x16x2xf32, #tpu.memory_space<vmem>>, vector<1x1x2xf32>
    %911 = vector.shape_cast %910 : vector<1x1x2xf32> to vector<2xf32>
    %912 = vector.shape_cast %822 : vector<2xf32> to vector<1x1x2xf32>
    tpu.vector_store %arg3[%c3_277, %c11_278, %c0_279], %912 {strides = array<i32>} : memref<4x16x2xf32, #tpu.memory_space<vmem>>, vector<1x1x2xf32>,
    %c3_280 = arith.constant 3 : index
    %c12_281 = arith.constant 12 : index
    %c0_282 = arith.constant 0 : index
    %913 = vector.load %arg3[%c3_280, %c12_281, %c0_282] : memref<4x16x2xf32, #tpu.memory_space<vmem>>, vector<1x1x2xf32>
    %914 = vector.shape_cast %913 : vector<1x1x2xf32> to vector<2xf32>
    %915 = vector.shape_cast %760 : vector<2xf32> to vector<1x1x2xf32>
    tpu.vector_store %arg3[%c3_280, %c12_281, %c0_282], %915 {strides = array<i32>} : memref<4x16x2xf32, #tpu.memory_space<vmem>>, vector<1x1x2xf32>,
    %c3_283 = arith.constant 3 : index
    %c13_284 = arith.constant 13 : index
    %c0_285 = arith.constant 0 : index
    %916 = vector.load %arg3[%c3_283, %c13_284, %c0_285] : memref<4x16x2xf32, #tpu.memory_space<vmem>>, vector<1x1x2xf32>
    %917 = vector.shape_cast %916 : vector<1x1x2xf32> to vector<2xf32>
    %918 = vector.shape_cast %771 : vector<2xf32> to vector<1x1x2xf32>
    tpu.vector_store %arg3[%c3_283, %c13_284, %c0_285], %918 {strides = array<i32>} : memref<4x16x2xf32, #tpu.memory_space<vmem>>, vector<1x1x2xf32>,
    %c3_286 = arith.constant 3 : index
    %c14_287 = arith.constant 14 : index
    %c0_288 = arith.constant 0 : index
    %919 = vector.load %arg3[%c3_286, %c14_287, %c0_288] : memref<4x16x2xf32, #tpu.memory_space<vmem>>, vector<1x1x2xf32>
    %920 = vector.shape_cast %919 : vector<1x1x2xf32> to vector<2xf32>
    %921 = vector.shape_cast %782 : vector<2xf32> to vector<1x1x2xf32>
    tpu.vector_store %arg3[%c3_286, %c14_287, %c0_288], %921 {strides = array<i32>} : memref<4x16x2xf32, #tpu.memory_space<vmem>>, vector<1x1x2xf32>,
    %c3_289 = arith.constant 3 : index
    %c15_290 = arith.constant 15 : index
    %c0_291 = arith.constant 0 : index
    %922 = vector.load %arg3[%c3_289, %c15_290, %c0_291] : memref<4x16x2xf32, #tpu.memory_space<vmem>>, vector<1x1x2xf32>
    %923 = vector.shape_cast %922 : vector<1x1x2xf32> to vector<2xf32>
    %924 = vector.shape_cast %828 : vector<2xf32> to vector<1x1x2xf32>
    tpu.vector_store %arg3[%c3_289, %c15_290, %c0_291], %924 {strides = array<i32>} : memref<4x16x2xf32, #tpu.memory_space<vmem>>, vector<1x1x2xf32>,
    return
  }
  func.func @transform_0(%arg0: i32) -> (i32, i32) {
    %c0_i32 = arith.constant 0 : i32
    %c0_i32_0 = arith.constant 0 : i32
    %c0_i32_1 = arith.constant 0 : i32
    return %c0_i32, %c0_i32_0 : i32, i32
  }
  func.func @transform_1(%arg0: i32) -> (i32, i32, i32) {
    %c0_i32 = arith.constant 0 : i32
    %c0_i32_0 = arith.constant 0 : i32
    %c0_i32_1 = arith.constant 0 : i32
    return %c0_i32, %c0_i32_0, %arg0 : i32, i32, i32
  }
  func.func @transform_2(%arg0: i32) -> (i32, i32, i32) {
    %c0_i32 = arith.constant 0 : i32
    %c0_i32_0 = arith.constant 0 : i32
    %c0_i32_1 = arith.constant 0 : i32
    return %c0_i32, %c0_i32_0, %arg0 : i32, i32, i32
  }
}

</mosaic_0001>

<llo_original>
// kernel: fk_layer_forward.1
$region0: #{fk_layer_forward.1}
  #allocation0 [shape = 'u32[]', space=smem, size = 0x4, offset = 0x4, fixed_abs, tag = 'smem constant byte address 0x4 - core index']
  #allocation1 [shape = 'u32[144,128]{1,0:T(1,128)}', space=vmem, size = 0x12000, scoped, tag = 'internal scratch']
  %s0 = inlined_call_operand.vmem [shape: f32[4,24], index: 0, kind: input, shape index: {}]
  %s1 = inlined_call_operand.vmem [shape: f32[4,4,2], index: 1, kind: input, shape index: {}]
  %s2 = inlined_call_operand.vmem [shape: f32[4,16,2], index: 2, kind: output, shape index: {}]
  %s3 = sld [smem:[#allocation0]]
  $region22: #{fk_layer_forward.1} parent=0
    _
  %s5 = ssub.s32 1, %s3
  %s6 = scalar_select 0, %s5, %s3
  $region1: #{fk_layer_forward.1} parent=0
    #allocation2 [shape = 'u8[2048]{0}', space=smem, size = 0x800, scoped, tag = 'input window, operand 0, single buffered']
    #allocation3 [shape = 's32[1]{0}', space=sflag, size = 0x4, scoped, tag = 'scoped memory for fk_layer_forward.1']
    %7 = vsyncpa [#allocation3], 0
    // Predicated region
    $region2: #{fk_layer_forward.1} parent=1 // pred_check
      _
    $region3: #{fk_layer_forward.1} parent=1 // pred_check_branch
      %9 = sbr.rel (0) target = $region5
    $region4: #{fk_layer_forward.1} parent=1 // pred_region
      %s11 = ssub.s32 64, 64
      %12 = vsyncadd [#allocation3], %s11
      %s14 = sshll.u32 %s0, 4
      %s15 = int_to_ptr.vmem [resolvable:$true] %s14
      %17 = dma.vmem_to_smem %s15, 64, [#allocation2], [#allocation3]
    $region5: #{fk_layer_forward.1} parent=1 // pred_fallthru
      _
    // Predicated region
    $region6: #{fk_layer_forward.1} parent=1 // pred_check
      _
    $region7: #{fk_layer_forward.1} parent=1 // pred_check_branch
      %19 = sbr.rel (0) target = $region9
    $region8: #{fk_layer_forward.1} parent=1 // pred_region
      _
    $region9: #{fk_layer_forward.1} parent=1 // pred_fallthru
      _
    // Predicated region
    $region10: #{fk_layer_forward.1} parent=1 // pred_check
      _
    $region11: #{fk_layer_forward.1} parent=1 // pred_check_branch
      %21 = sbr.rel (0) target = $region13
    $region12: #{fk_layer_forward.1} parent=1 // pred_region
      %22 = dma.done [#allocation3], 64
    $region13: #{fk_layer_forward.1} parent=1 // pred_fallthru
      _
    %23 = sfence
    %s24 = sld [smem:[#allocation2]]
    %s25 = sld [smem:[#allocation2 + $0x1]]
    %s26 = sld [smem:[#allocation2 + $0x2]]
    %s27 = sld [smem:[#allocation2 + $0x3]]
    %s28 = sld [smem:[#allocation2 + $0x4]]
    %s29 = sld [smem:[#allocation2 + $0x5]]
    %s30 = sld [smem:[#allocation2 + $0x6]]
    %s31 = sld [smem:[#allocation2 + $0x7]]
    %s32 = sld [smem:[#allocation2 + $0x8]]
    %s33 = sld [smem:[#allocation2 + $0x9]]
    %s34 = sld [smem:[#allocation2 + $0xa]]
    %s35 = sld [smem:[#allocation2 + $0xb]]
    %s36 = sld [smem:[#allocation2 + $0xc]]
    %s37 = sld [smem:[#allocation2 + $0xd]]
    %s38 = sld [smem:[#allocation2 + $0xe]]
    %s39 = sld [smem:[#allocation2 + $0xf]]
    %v40 = vstv %s24
    %v41 = vstv %s28
    %v42 = vmul.f32 %v41, 0.0
    %v43 = vadd.f32 %v40, %v42
    %v44 = vstv %s32
    %v45 = vmul.f32 %v44, 0.0
    %v46 = vadd.f32 %v43, %v45
    %v47 = vstv %s36
    %v48 = vmul.f32 %v47, 0.0
    %v49 = vadd.f32 %v46, %v48
    %v50 = vstv %s25
    %v51 = vstv %s29
    %v52 = vmul.f32 %v51, 0.0
    %v53 = vadd.f32 %v50, %v52
    %v54 = vstv %s33
    %v55 = vmul.f32 %v54, 0.0
    %v56 = vadd.f32 %v53, %v55
    %v57 = vstv %s37
    %v58 = vmul.f32 %v57, 0.0
    %v59 = vadd.f32 %v56, %v58
    %v60 = vstv %s26
    %v61 = vstv %s30
    %v62 = vmul.f32 %v61, 0.0
    %v63 = vadd.f32 %v60, %v62
    %v64 = vstv %s34
    %v65 = vmul.f32 %v64, 0.0
    %v66 = vadd.f32 %v63, %v65
    %v67 = vstv %s38
    %v68 = vmul.f32 %v67, 0.0
    %v69 = vadd.f32 %v66, %v68
    %v70 = vstv %s27
    %v71 = vstv %s31
    %v72 = vmul.f32 %v71, 0.0
    %v73 = vadd.f32 %v70, %v72
    %v74 = vstv %s35
    %v75 = vmul.f32 %v74, 0.0
    %v76 = vadd.f32 %v73, %v75
    %v77 = vstv %s39
    %v78 = vmul.f32 %v77, 0.0
    %v79 = vadd.f32 %v76, %v78
    %v80 = vmul.f32 %v40, 0.0
    %v81 = vadd.f32 %v80, %v41
    %v82 = vadd.f32 %v81, %v45
    %v83 = vadd.f32 %v82, %v48
    %v84 = vmul.f32 %v50, 0.0
    %v85 = vadd.f32 %v84, %v51
    %v86 = vadd.f32 %v85, %v55
    %v87 = vadd.f32 %v86, %v58
    %v88 = vmul.f32 %v60, 0.0
    %v89 = vadd.f32 %v88, %v61
    %v90 = vadd.f32 %v89, %v65
    %v91 = vadd.f32 %v90, %v68
    %v92 = vmul.f32 %v70, 0.0
    %v93 = vadd.f32 %v92, %v71
    %v94 = vadd.f32 %v93, %v75
    %v95 = vadd.f32 %v94, %v78
    %v96 = vadd.f32 %v80, %v42
    %v97 = vadd.f32 %v96, %v44
    %v98 = vadd.f32 %v97, %v48
    %v99 = vadd.f32 %v84, %v52
    %v100 = vadd.f32 %v99, %v54
    %v101 = vadd.f32 %v100, %v58
    %v102 = vadd.f32 %v88, %v62
    %v103 = vadd.f32 %v102, %v64
    %v104 = vadd.f32 %v103, %v68
    %v105 = vadd.f32 %v92, %v72
    %v106 = vadd.f32 %v105, %v74
    %v107 = vadd.f32 %v106, %v78
    %v108 = vadd.f32 %v96, %v45
    %v109 = vadd.f32 %v108, %v47
    %v110 = vadd.f32 %v99, %v55
    %v111 = vadd.f32 %v110, %v57
    %v112 = vadd.f32 %v102, %v65
    %v113 = vadd.f32 %v112, %v67
    %v114 = vadd.f32 %v105, %v75
    %v115 = vadd.f32 %v114, %v77
    %vm116 = vcmask 8192
    %117 = vst.msk [vmem:[%s2] sm:$0x1] %vm116, %v49
    %118 = vst.msk [vmem:[%s2 + $0x1] sm:$0x1] %vm116, %v59
    %119 = vst.msk [vmem:[%s2 + $0x2] sm:$0x1] %vm116, %v69
    %120 = vst.msk [vmem:[%s2 + $0x3] sm:$0x1] %vm116, %v79
    %121 = vst.msk [vmem:[%s2 + $0x4] sm:$0x1] %vm116, %v83
    %122 = vst.msk [vmem:[%s2 + $0x5] sm:$0x1] %vm116, %v87
    %123 = vst.msk [vmem:[%s2 + $0x6] sm:$0x1] %vm116, %v91
    %124 = vst.msk [vmem:[%s2 + $0x7] sm:$0x1] %vm116, %v95
    %125 = vst.msk [vmem:[%s2 + $0x8] sm:$0x1] %vm116, %v98
    %126 = vst.msk [vmem:[%s2 + $0x9] sm:$0x1] %vm116, %v101
    %127 = vst.msk [vmem:[%s2 + $0xa] sm:$0x1] %vm116, %v104
    %128 = vst.msk [vmem:[%s2 + $0xb] sm:$0x1] %vm116, %v107
    %129 = vst.msk [vmem:[%s2 + $0xc] sm:$0x1] %vm116, %v109
    %130 = vst.msk [vmem:[%s2 + $0xd] sm:$0x1] %vm116, %v111
    %131 = vst.msk [vmem:[%s2 + $0xe] sm:$0x1] %vm116, %v113
    %132 = vst.msk [vmem:[%s2 + $0xf] sm:$0x1] %vm116, %v115
    %s133 = sld [smem:[#allocation2 + $0x80]]
    %s134 = sld [smem:[#allocation2 + $0x81]]
    %s135 = sld [smem:[#allocation2 + $0x82]]
    %s136 = sld [smem:[#allocation2 + $0x83]]
    %s137 = sld [smem:[#allocation2 + $0x84]]
    %s138 = sld [smem:[#allocation2 + $0x85]]
    %s139 = sld [smem:[#allocation2 + $0x86]]
    %s140 = sld [smem:[#allocation2 + $0x87]]
    %s141 = sld [smem:[#allocation2 + $0x88]]
    %s142 = sld [smem:[#allocation2 + $0x89]]
    %s143 = sld [smem:[#allocation2 + $0x8a]]
    %s144 = sld [smem:[#allocation2 + $0x8b]]
    %s145 = sld [smem:[#allocation2 + $0x8c]]
    %s146 = sld [smem:[#allocation2 + $0x8d]]
    %s147 = sld [smem:[#allocation2 + $0x8e]]
    %s148 = sld [smem:[#allocation2 + $0x8f]]
    %v149 = vstv %s133
    %v150 = vmul.f32 %v49, %v149
    %v151 = vstv %s137
    %v152 = vmul.f32 %v59, %v151
    %v153 = vadd.f32 %v150, %v152
    %v154 = vstv %s141
    %v155 = vmul.f32 %v69, %v154
    %v156 = vadd.f32 %v153, %v155
    %v157 = vstv %s145
    %v158 = vmul.f32 %v79, %v157
    %v159 = vadd.f32 %v156, %v158
    %v160 = vstv %s134
    %v161 = vmul.f32 %v49, %v160
    %v162 = vstv %s138
    %v163 = vmul.f32 %v59, %v162
    %v164 = vadd.f32 %v161, %v163
    %v165 = vstv %s142
    %v166 = vmul.f32 %v69, %v165
    %v167 = vadd.f32 %v164, %v166
    %v168 = vstv %s146
    %v169 = vmul.f32 %v79, %v168
    %v170 = vadd.f32 %v167, %v169
    %v171 = vstv %s135
    %v172 = vmul.f32 %v49, %v171
    %v173 = vstv %s139
    %v174 = vmul.f32 %v59, %v173
    %v175 = vadd.f32 %v172, %v174
    %v176 = vstv %s143
    %v177 = vmul.f32 %v69, %v176
    %v178 = vadd.f32 %v175, %v177
    %v179 = vstv %s147
    %v180 = vmul.f32 %v79, %v179
    %v181 = vadd.f32 %v178, %v180
    %v182 = vstv %s136
    %v183 = vmul.f32 %v49, %v182
    %v184 = vstv %s140
    %v185 = vmul.f32 %v59, %v184
    %v186 = vadd.f32 %v183, %v185
    %v187 = vstv %s144
    %v188 = vmul.f32 %v69, %v187
    %v189 = vadd.f32 %v186, %v188
    %v190 = vstv %s148
    %v191 = vmul.f32 %v79, %v190
    %v192 = vadd.f32 %v189, %v191
    %v193 = vmul.f32 %v83, %v149
    %v194 = vmul.f32 %v87, %v151
    %v195 = vadd.f32 %v193, %v194
    %v196 = vmul.f32 %v91, %v154
    %v197 = vadd.f32 %v195, %v196
    %v198 = vmul.f32 %v95, %v157
    %v199 = vadd.f32 %v197, %v198
    %v200 = vmul.f32 %v83, %v160
    %v201 = vmul.f32 %v87, %v162
    %v202 = vadd.f32 %v200, %v201
    %v203 = vmul.f32 %v91, %v165
    %v204 = vadd.f32 %v202, %v203
    %v205 = vmul.f32 %v95, %v168
    %v206 = vadd.f32 %v204, %v205
    %v207 = vmul.f32 %v83, %v171
    %v208 = vmul.f32 %v87, %v173
    %v209 = vadd.f32 %v207, %v208
    %v210 = vmul.f32 %v91, %v176
    %v211 = vadd.f32 %v209, %v210
    %v212 = vmul.f32 %v95, %v179
    %v213 = vadd.f32 %v211, %v212
    %v214 = vmul.f32 %v83, %v182
    %v215 = vmul.f32 %v87, %v184
    %v216 = vadd.f32 %v214, %v215
    %v217 = vmul.f32 %v91, %v187
    %v218 = vadd.f32 %v216, %v217
    %v219 = vmul.f32 %v95, %v190
    %v220 = vadd.f32 %v218, %v219
    %v221 = vmul.f32 %v98, %v149
    %v222 = vmul.f32 %v101, %v151
    %v223 = vadd.f32 %v221, %v222
    %v224 = vmul.f32 %v104, %v154
    %v225 = vadd.f32 %v223, %v224
    %v226 = vmul.f32 %v107, %v157
    %v227 = vadd.f32 %v225, %v226
    %v228 = vmul.f32 %v98, %v160
    %v229 = vmul.f32 %v101, %v162
    %v230 = vadd.f32 %v228, %v229
    %v231 = vmul.f32 %v104, %v165
    %v232 = vadd.f32 %v230, %v231
    %v233 = vmul.f32 %v107, %v168
    %v234 = vadd.f32 %v232, %v233
    %v235 = vmul.f32 %v98, %v171
    %v236 = vmul.f32 %v101, %v173
    %v237 = vadd.f32 %v235, %v236
    %v238 = vmul.f32 %v104, %v176
    %v239 = vadd.f32 %v237, %v238
    %v240 = vmul.f32 %v107, %v179
    %v241 = vadd.f32 %v239, %v240
    %v242 = vmul.f32 %v98, %v182
    %v243 = vmul.f32 %v101, %v184
    %v244 = vadd.f32 %v242, %v243
    %v245 = vmul.f32 %v104, %v187
    %v246 = vadd.f32 %v244, %v245
    %v247 = vmul.f32 %v107, %v190
    %v248 = vadd.f32 %v246, %v247
    %v249 = vmul.f32 %v109, %v149
    %v250 = vmul.f32 %v111, %v151
    %v251 = vadd.f32 %v249, %v250
    %v252 = vmul.f32 %v113, %v154
    %v253 = vadd.f32 %v251, %v252
    %v254 = vmul.f32 %v115, %v157
    %v255 = vadd.f32 %v253, %v254
    %v256 = vmul.f32 %v109, %v160
    %v257 = vmul.f32 %v111, %v162
    %v258 = vadd.f32 %v256, %v257
    %v259 = vmul.f32 %v113, %v165
    %v260 = vadd.f32 %v258, %v259
    %v261 = vmul.f32 %v115, %v168
    %v262 = vadd.f32 %v260, %v261
    %v263 = vmul.f32 %v109, %v171
    %v264 = vmul.f32 %v111, %v173
    %v265 = vadd.f32 %v263, %v264
    %v266 = vmul.f32 %v113, %v176
    %v267 = vadd.f32 %v265, %v266
    %v268 = vmul.f32 %v115, %v179
    %v269 = vadd.f32 %v267, %v268
    %v270 = vmul.f32 %v109, %v182
    %v271 = vmul.f32 %v111, %v184
    %v272 = vadd.f32 %v270, %v271
    %v273 = vmul.f32 %v113, %v187
    %v274 = vadd.f32 %v272, %v273
    %v275 = vmul.f32 %v115, %v190
    %v276 = vadd.f32 %v274, %v275
    %s277 = scalar_lea.vmem %s1, 4
    %v278 = vld [vmem:[%s277 + $0x1] sm:$0x1]
    %v279 = vld [vmem:[%s277 + $0x2] sm:$0x1]
    %v280 = vsub.f32 1.0, %v279
    %s281 = sld [smem:[#allocation2 + $0x90]]
    %s282 = sld [smem:[#allocation2 + $0x91]]
    %s283 = sld [smem:[#allocation2 + $0x92]]
    %s284 = ssub.f32 0.0, %s283
    %s285 = ssub.f32 0.0, %s281
    %s286 = ssub.f32 0.0, %s282
    %s287 = smul.f32 %s281, %s281
    %v288 = vstv %s287
    %v289 = vmul.f32 %v280, %v288
    %v290 = vadd.f32 %v279, %v289
    %s291 = smul.f32 %s281, %s282
    %v292 = vstv %s291
    %v293 = vmul.f32 %v280, %v292
    %v294 = vstv %s284
    %v295 = vmul.f32 %v278, %v294
    %v296 = vadd.f32 %v293, %v295
    %s297 = smul.f32 %s281, %s283
    %v298 = vstv %s297
    %v299 = vmul.f32 %v280, %v298
    %v300 = vstv %s282
    %v301 = vmul.f32 %v278, %v300
    %v302 = vadd.f32 %v299, %v301
    %v303 = vstv %s283
    %v304 = vmul.f32 %v278, %v303
    %v305 = vadd.f32 %v293, %v304
    %s306 = smul.f32 %s282, %s282
    %v307 = vstv %s306
    %v308 = vmul.f32 %v280, %v307
    %v309 = vadd.f32 %v279, %v308
    %s310 = smul.f32 %s282, %s283
    %v311 = vstv %s310
    %v312 = vmul.f32 %v280, %v311
    %v313 = vstv %s285
    %v314 = vmul.f32 %v278, %v313
    %v315 = vadd.f32 %v312, %v314
    %v316 = vstv %s286
    %v317 = vmul.f32 %v278, %v316
    %v318 = vadd.f32 %v299, %v317
    %v319 = vstv %s281
    %v320 = vmul.f32 %v278, %v319
    %v321 = vadd.f32 %v312, %v320
    %s322 = smul.f32 %s283, %s283
    %v323 = vstv %s322
    %v324 = vmul.f32 %v280, %v323
    %v325 = vadd.f32 %v279, %v324
    %v326 = vmul.f32 %v159, %v290
    %v327 = vmul.f32 %v170, %v305
    %v328 = vadd.f32 %v326, %v327
    %v329 = vmul.f32 %v181, %v318
    %v330 = vadd.f32 %v328, %v329
    %v331 = vmul.f32 %v159, %v296
    %v332 = vmul.f32 %v170, %v309
    %v333 = vadd.f32 %v331, %v332
    %v334 = vmul.f32 %v181, %v321
    %v335 = vadd.f32 %v333, %v334
    %v336 = vmul.f32 %v159, %v302
    %v337 = vmul.f32 %v170, %v315
    %v338 = vadd.f32 %v336, %v337
    %v339 = vmul.f32 %v181, %v325
    %v340 = vadd.f32 %v338, %v339
    %v341 = vmul.f32 %v199, %v290
    %v342 = vmul.f32 %v206, %v305
    %v343 = vadd.f32 %v341, %v342
    %v344 = vmul.f32 %v213, %v318
    %v345 = vadd.f32 %v343, %v344
    %v346 = vmul.f32 %v199, %v296
    %v347 = vmul.f32 %v206, %v309
    %v348 = vadd.f32 %v346, %v347
    %v349 = vmul.f32 %v213, %v321
    %v350 = vadd.f32 %v348, %v349
    %v351 = vmul.f32 %v199, %v302
    %v352 = vmul.f32 %v206, %v315
    %v353 = vadd.f32 %v351, %v352
    %v354 = vmul.f32 %v213, %v325
    %v355 = vadd.f32 %v353, %v354
    %v356 = vmul.f32 %v227, %v290
    %v357 = vmul.f32 %v234, %v305
    %v358 = vadd.f32 %v356, %v357
    %v359 = vmul.f32 %v241, %v318
    %v360 = vadd.f32 %v358, %v359
    %v361 = vmul.f32 %v227, %v296
    %v362 = vmul.f32 %v234, %v309
    %v363 = vadd.f32 %v361, %v362
    %v364 = vmul.f32 %v241, %v321
    %v365 = vadd.f32 %v363, %v364
    %v366 = vmul.f32 %v227, %v302
    %v367 = vmul.f32 %v234, %v315
    %v368 = vadd.f32 %v366, %v367
    %v369 = vmul.f32 %v241, %v325
    %v370 = vadd.f32 %v368, %v369
    %v371 = vmul.f32 %v255, %v290
    %v372 = vmul.f32 %v262, %v305
    %v373 = vadd.f32 %v371, %v372
    %v374 = vmul.f32 %v269, %v318
    %v375 = vadd.f32 %v373, %v374
    %v376 = vmul.f32 %v255, %v296
    %v377 = vmul.f32 %v262, %v309
    %v378 = vadd.f32 %v376, %v377
    %v379 = vmul.f32 %v269, %v321
    %v380 = vadd.f32 %v378, %v379
    %v381 = vmul.f32 %v255, %v302
    %v382 = vmul.f32 %v262, %v315
    %v383 = vadd.f32 %v381, %v382
    %v384 = vmul.f32 %v269, %v325
    %v385 = vadd.f32 %v383, %v384
    %s386 = scalar_lea.vmem %s2, 16
    %387 = vst.msk [vmem:[%s386] sm:$0x1] %vm116, %v330
    %388 = vst.msk [vmem:[%s386 + $0x1] sm:$0x1] %vm116, %v335
    %389 = vst.msk [vmem:[%s386 + $0x2] sm:$0x1] %vm116, %v340
    %390 = vst.msk [vmem:[%s386 + $0x3] sm:$0x1] %vm116, %v192
    %391 = vst.msk [vmem:[%s386 + $0x4] sm:$0x1] %vm116, %v345
    %392 = vst.msk [vmem:[%s386 + $0x5] sm:$0x1] %vm116, %v350
    %393 = vst.msk [vmem:[%s386 + $0x6] sm:$0x1] %vm116, %v355
    %394 = vst.msk [vmem:[%s386 + $0x7] sm:$0x1] %vm116, %v220
    %395 = vst.msk [vmem:[%s386 + $0x8] sm:$0x1] %vm116, %v360
    %396 = vst.msk [vmem:[%s386 + $0x9] sm:$0x1] %vm116, %v365
    %397 = vst.msk [vmem:[%s386 + $0xa] sm:$0x1] %vm116, %v370
    %398 = vst.msk [vmem:[%s386 + $0xb] sm:$0x1] %vm116, %v248
    %399 = vst.msk [vmem:[%s386 + $0xc] sm:$0x1] %vm116, %v375
    %400 = vst.msk [vmem:[%s386 + $0xd] sm:$0x1] %vm116, %v380
    %401 = vst.msk [vmem:[%s386 + $0xe] sm:$0x1] %vm116, %v385
    %402 = vst.msk [vmem:[%s386 + $0xf] sm:$0x1] %vm116, %v276
    %s403 = sld [smem:[#allocation2 + $0x100]]
    %s404 = sld [smem:[#allocation2 + $0x101]]
    %s405 = sld [smem:[#allocation2 + $0x102]]
    %s406 = sld [smem:[#allocation2 + $0x103]]
    %s407 = sld [smem:[#allocation2 + $0x104]]
    %s408 = sld [smem:[#allocation2 + $0x105]]
    %s409 = sld [smem:[#allocation2 + $0x106]]
    %s410 = sld [smem:[#allocation2 + $0x107]]
    %s411 = sld [smem:[#allocation2 + $0x108]]
    %s412 = sld [smem:[#allocation2 + $0x109]]
    %s413 = sld [smem:[#allocation2 + $0x10a]]
    %s414 = sld [smem:[#allocation2 + $0x10b]]
    %s415 = sld [smem:[#allocation2 + $0x10c]]
    %s416 = sld [smem:[#allocation2 + $0x10d]]
    %s417 = sld [smem:[#allocation2 + $0x10e]]
    %s418 = sld [smem:[#allocation2 + $0x10f]]
    %v419 = vstv %s403
    %v420 = vmul.f32 %v330, %v419
    %v421 = vstv %s407
    %v422 = vmul.f32 %v335, %v421
    %v423 = vadd.f32 %v420, %v422
    %v424 = vstv %s411
    %v425 = vmul.f32 %v340, %v424
    %v426 = vadd.f32 %v423, %v425
    %v427 = vstv %s415
    %v428 = vmul.f32 %v192, %v427
    %v429 = vadd.f32 %v426, %v428
    %v430 = vstv %s404
    %v431 = vmul.f32 %v330, %v430
    %v432 = vstv %s408
    %v433 = vmul.f32 %v335, %v432
    %v434 = vadd.f32 %v431, %v433
    %v435 = vstv %s412
    %v436 = vmul.f32 %v340, %v435
    %v437 = vadd.f32 %v434, %v436
    %v438 = vstv %s416
    %v439 = vmul.f32 %v192, %v438
    %v440 = vadd.f32 %v437, %v439
    %v441 = vstv %s405
    %v442 = vmul.f32 %v330, %v441
    %v443 = vstv %s409
    %v444 = vmul.f32 %v335, %v443
    %v445 = vadd.f32 %v442, %v444
    %v446 = vstv %s413
    %v447 = vmul.f32 %v340, %v446
    %v448 = vadd.f32 %v445, %v447
    %v449 = vstv %s417
    %v450 = vmul.f32 %v192, %v449
    %v451 = vadd.f32 %v448, %v450
    %v452 = vstv %s406
    %v453 = vmul.f32 %v330, %v452
    %v454 = vstv %s410
    %v455 = vmul.f32 %v335, %v454
    %v456 = vadd.f32 %v453, %v455
    %v457 = vstv %s414
    %v458 = vmul.f32 %v340, %v457
    %v459 = vadd.f32 %v456, %v458
    %v460 = vstv %s418
    %v461 = vmul.f32 %v192, %v460
    %v462 = vadd.f32 %v459, %v461
    %v463 = vmul.f32 %v345, %v419
    %v464 = vmul.f32 %v350, %v421
    %v465 = vadd.f32 %v463, %v464
    %v466 = vmul.f32 %v355, %v424
    %v467 = vadd.f32 %v465, %v466
    %v468 = vmul.f32 %v220, %v427
    %v469 = vadd.f32 %v467, %v468
    %v470 = vmul.f32 %v345, %v430
    %v471 = vmul.f32 %v350, %v432
    %v472 = vadd.f32 %v470, %v471
    %v473 = vmul.f32 %v355, %v435
    %v474 = vadd.f32 %v472, %v473
    %v475 = vmul.f32 %v220, %v438
    %v476 = vadd.f32 %v474, %v475
    %v477 = vmul.f32 %v345, %v441
    %v478 = vmul.f32 %v350, %v443
    %v479 = vadd.f32 %v477, %v478
    %v480 = vmul.f32 %v355, %v446
    %v481 = vadd.f32 %v479, %v480
    %v482 = vmul.f32 %v220, %v449
    %v483 = vadd.f32 %v481, %v482
    %v484 = vmul.f32 %v345, %v452
    %v485 = vmul.f32 %v350, %v454
    %v486 = vadd.f32 %v484, %v485
    %v487 = vmul.f32 %v355, %v457
    %v488 = vadd.f32 %v486, %v487
    %v489 = vmul.f32 %v220, %v460
    %v490 = vadd.f32 %v488, %v489
    %v491 = vmul.f32 %v360, %v419
    %v492 = vmul.f32 %v365, %v421
    %v493 = vadd.f32 %v491, %v492
    %v494 = vmul.f32 %v370, %v424
    %v495 = vadd.f32 %v493, %v494
    %v496 = vmul.f32 %v248, %v427
    %v497 = vadd.f32 %v495, %v496
    %v498 = vmul.f32 %v360, %v430
    %v499 = vmul.f32 %v365, %v432
    %v500 = vadd.f32 %v498, %v499
    %v501 = vmul.f32 %v370, %v435
    %v502 = vadd.f32 %v500, %v501
    %v503 = vmul.f32 %v248, %v438
    %v504 = vadd.f32 %v502, %v503
    %v505 = vmul.f32 %v360, %v441
    %v506 = vmul.f32 %v365, %v443
    %v507 = vadd.f32 %v505, %v506
    %v508 = vmul.f32 %v370, %v446
    %v509 = vadd.f32 %v507, %v508
    %v510 = vmul.f32 %v248, %v449
    %v511 = vadd.f32 %v509, %v510
    %v512 = vmul.f32 %v360, %v452
    %v513 = vmul.f32 %v365, %v454
    %v514 = vadd.f32 %v512, %v513
    %v515 = vmul.f32 %v370, %v457
    %v516 = vadd.f32 %v514, %v515
    %v517 = vmul.f32 %v248, %v460
    %v518 = vadd.f32 %v516, %v517
    %v519 = vmul.f32 %v375, %v419
    %v520 = vmul.f32 %v380, %v421
    %v521 = vadd.f32 %v519, %v520
    %v522 = vmul.f32 %v385, %v424
    %v523 = vadd.f32 %v521, %v522
    %v524 = vmul.f32 %v276, %v427
    %v525 = vadd.f32 %v523, %v524
    %v526 = vmul.f32 %v375, %v430
    %v527 = vmul.f32 %v380, %v432
    %v528 = vadd.f32 %v526, %v527
    %v529 = vmul.f32 %v385, %v435
    %v530 = vadd.f32 %v528, %v529
    %v531 = vmul.f32 %v276, %v438
    %v532 = vadd.f32 %v530, %v531
    %v533 = vmul.f32 %v375, %v441
    %v534 = vmul.f32 %v380, %v443
    %v535 = vadd.f32 %v533, %v534
    %v536 = vmul.f32 %v385, %v446
    %v537 = vadd.f32 %v535, %v536
    %v538 = vmul.f32 %v276, %v449
    %v539 = vadd.f32 %v537, %v538
    %v540 = vmul.f32 %v375, %v452
    %v541 = vmul.f32 %v380, %v454
    %v542 = vadd.f32 %v540, %v541
    %v543 = vmul.f32 %v385, %v457
    %v544 = vadd.f32 %v542, %v543
    %v545 = vmul.f32 %v276, %v460
    %v546 = vadd.f32 %v544, %v545
    %s547 = scalar_lea.vmem %s1, 8
    %v548 = vld [vmem:[%s547] sm:$0x1]
    %s549 = sld [smem:[#allocation2 + $0x114]]
    %v550 = vstv %s549
    %v551 = vmul.f32 %v548, %v550
    %s552 = sld [smem:[#allocation2 + $0x115]]
    %v553 = vstv %s552
    %v554 = vmul.f32 %v548, %v553
    %s555 = sld [smem:[#allocation2 + $0x116]]
    %v556 = vstv %s555
    %v557 = vmul.f32 %v548, %v556
    %v558 = vmul.f32 %v429, %v551
    %v559 = vmul.f32 %v440, %v554
    %v560 = vadd.f32 %v558, %v559
    %v561 = vmul.f32 %v451, %v557
    %v562 = vadd.f32 %v560, %v561
    %v563 = vadd.f32 %v562, %v462
    %v564 = vmul.f32 %v469, %v551
    %v565 = vmul.f32 %v476, %v554
    %v566 = vadd.f32 %v564, %v565
    %v567 = vmul.f32 %v483, %v557
    %v568 = vadd.f32 %v566, %v567
    %v569 = vadd.f32 %v568, %v490
    %v570 = vmul.f32 %v497, %v551
    %v571 = vmul.f32 %v504, %v554
    %v572 = vadd.f32 %v570, %v571
    %v573 = vmul.f32 %v511, %v557
    %v574 = vadd.f32 %v572, %v573
    %v575 = vadd.f32 %v574, %v518
    %v576 = vmul.f32 %v525, %v551
    %v577 = vmul.f32 %v532, %v554
    %v578 = vadd.f32 %v576, %v577
    %v579 = vmul.f32 %v539, %v557
    %v580 = vadd.f32 %v578, %v579
    %v581 = vadd.f32 %v580, %v546
    %s582 = scalar_lea.vmem %s2, 32
    %583 = vst.msk [vmem:[%s582] sm:$0x1] %vm116, %v429
    %584 = vst.msk [vmem:[%s582 + $0x1] sm:$0x1] %vm116, %v440
    %585 = vst.msk [vmem:[%s582 + $0x2] sm:$0x1] %vm116, %v451
    %586 = vst.msk [vmem:[%s582 + $0x3] sm:$0x1] %vm116, %v563
    %587 = vst.msk [vmem:[%s582 + $0x4] sm:$0x1] %vm116, %v469
    %588 = vst.msk [vmem:[%s582 + $0x5] sm:$0x1] %vm116, %v476
    %589 = vst.msk [vmem:[%s582 + $0x6] sm:$0x1] %vm116, %v483
    %590 = vst.msk [vmem:[%s582 + $0x7] sm:$0x1] %vm116, %v569
    %591 = vst.msk [vmem:[%s582 + $0x8] sm:$0x1] %vm116, %v497
    %592 = vst.msk [vmem:[%s582 + $0x9] sm:$0x1] %vm116, %v504
    %593 = vst.msk [vmem:[%s582 + $0xa] sm:$0x1] %vm116, %v511
    %594 = vst.msk [vmem:[%s582 + $0xb] sm:$0x1] %vm116, %v575
    %595 = vst.msk [vmem:[%s582 + $0xc] sm:$0x1] %vm116, %v525
    %596 = vst.msk [vmem:[%s582 + $0xd] sm:$0x1] %vm116, %v532
    %597 = vst.msk [vmem:[%s582 + $0xe] sm:$0x1] %vm116, %v539
    %598 = vst.msk [vmem:[%s582 + $0xf] sm:$0x1] %vm116, %v581
    %s599 = scalar_lea.vmem %s2, 48
    %600 = vst.msk [vmem:[%s599] sm:$0x1] %vm116, %v429
    %601 = vst.msk [vmem:[%s599 + $0x1] sm:$0x1] %vm116, %v440
    %602 = vst.msk [vmem:[%s599 + $0x2] sm:$0x1] %vm116, %v451
    %603 = vst.msk [vmem:[%s599 + $0x3] sm:$0x1] %vm116, %v563
    %604 = vst.msk [vmem:[%s599 + $0x4] sm:$0x1] %vm116, %v469
    %605 = vst.msk [vmem:[%s599 + $0x5] sm:$0x1] %vm116, %v476
    %606 = vst.msk [vmem:[%s599 + $0x6] sm:$0x1] %vm116, %v483
    %607 = vst.msk [vmem:[%s599 + $0x7] sm:$0x1] %vm116, %v569
    %608 = vst.msk [vmem:[%s599 + $0x8] sm:$0x1] %vm116, %v497
    %609 = vst.msk [vmem:[%s599 + $0x9] sm:$0x1] %vm116, %v504
    %610 = vst.msk [vmem:[%s599 + $0xa] sm:$0x1] %vm116, %v511
    %611 = vst.msk [vmem:[%s599 + $0xb] sm:$0x1] %vm116, %v575
    %612 = vst.msk [vmem:[%s599 + $0xc] sm:$0x1] %vm116, %v525
    %613 = vst.msk [vmem:[%s599 + $0xd] sm:$0x1] %vm116, %v532
    %614 = vst.msk [vmem:[%s599 + $0xe] sm:$0x1] %vm116, %v539
    %615 = vst.msk [vmem:[%s599 + $0xf] sm:$0x1] %vm116, %v581
    // Predicated region
    $region14: #{fk_layer_forward.1} parent=1 // pred_check
      _
    $region15: #{fk_layer_forward.1} parent=1 // pred_check_branch
      %617 = sbr.rel (0) target = $region17
    $region16: #{fk_layer_forward.1} parent=1 // pred_region
      _
    $region17: #{fk_layer_forward.1} parent=1 // pred_fallthru
      _
    // Predicated region
    $region18: #{fk_layer_forward.1} parent=1 // pred_check
      _
    $region19: #{fk_layer_forward.1} parent=1 // pred_check_branch
      %619 = sbr.rel (0) target = $region21
    $region20: #{fk_layer_forward.1} parent=1 // pred_region
      _
    $region21: #{fk_layer_forward.1} parent=1 // pred_fallthru
      _
    %620 = vsyncpa [#allocation3], 1

</llo_original>
